<compile_context>
chip_gen: v7x
topology: tpu7x:2x2x1
jax: 0.10.0
libtpu: 0.0.40
codegen_flags: <defaults>
</compile_context>

<pallas_src>
import jax
import jax.numpy as jnp
from jax.experimental import pallas as pl
from jax.experimental.pallas import tpu as pltpu

Z_SIZE = 128        # z_size
HIDDEN = 1024       # fc1 output features
BN_EPS = 1e-5
NUM_CHUNKS = 4      # HIDDEN chunking inside the kernel
CHUNK = HIDDEN // NUM_CHUNKS
HEADS = 2 * Z_SIZE  # concatenated mu / logvar width


def _round_up(v, m):
    return ((v + m - 1) // m) * m


def cognitive_encoder_kernel(x_ref, w1_ref, bn_shift_ref, wh_ref, bh_ref,
                             heads_ref):
    """One batch tile of the CognitiveEncoder forward.

    x_ref        : (TM, input_size)      f32
    w1_ref       : (input_size, HIDDEN)  bf16   fc1 weight with BN scale folded in
    bn_shift_ref : (1, HIDDEN)           f32    beta - running_mean * scale
    wh_ref       : (HIDDEN, 2*Z_SIZE)    bf16   concat(W_mu, W_var)
    bh_ref       : (1, 2*Z_SIZE)         f32    concat(b_mu, b_var)
    heads_ref    : (TM, 2*Z_SIZE)        f32    concat(mu, logvar)
    """
    x = x_ref[...].astype(jnp.bfloat16)

    acc = jnp.zeros(heads_ref.shape, jnp.float32)
    # Chunk the 1024-wide hidden so the f32 intermediate never fully
    # materializes (avoids vreg -> VMEM spill); fc1 / head matmuls interleave.
    for c in range(NUM_CHUNKS):
        lo, hi = c * CHUNK, (c + 1) * CHUNK
        h = jnp.dot(x, w1_ref[:, lo:hi], preferred_element_type=jnp.float32)
        h = jnp.maximum(h + bn_shift_ref[:, lo:hi], 0.0)
        acc = acc + jnp.dot(h.astype(jnp.bfloat16), wh_ref[lo:hi, :],
                            preferred_element_type=jnp.float32)

    heads_ref[...] = acc + bh_ref[...]


def init_params(key, input_size, z_size=Z_SIZE):
    """Deterministic init matching the PyTorch module:
       Linear weights: xavier_normal_(gain=1); Linear biases: 0.
       BatchNorm running stats get small non-trivial values so the BN path is
       exercised.  The BN scale is folded into the fc1 weight in f32 (exact,
       since fc1 has no bias) and only then cast to bf16; the two heads are
       concatenated.  All layout prep happens ONCE here, not per forward."""
    k1, k2, k3, k4, k5, k6 = jax.random.split(key, 6)

    def xavier(k, fan_in, fan_out):
        std = (2.0 / (fan_in + fan_out)) ** 0.5
        return std * jax.random.normal(k, (fan_in, fan_out), dtype=jnp.float32)

    w1 = xavier(k1, input_size, HIDDEN)          # fc1, bias=False
    wmu = xavier(k2, HIDDEN, z_size)
    wvar = xavier(k3, HIDDEN, z_size)

    # BatchNorm1d (inference mode) parameters / running stats.
    gamma = 1.0 + 0.1 * jax.random.normal(k4, (HIDDEN,), jnp.float32)
    beta = 0.1 * jax.random.normal(k5, (HIDDEN,), jnp.float32)
    running_mean = 0.1 * jax.random.normal(k6, (HIDDEN,), jnp.float32)
    running_var = jnp.ones((HIDDEN,), jnp.float32)

    scale = gamma / jnp.sqrt(running_var + BN_EPS)
    shift = beta - running_mean * scale

    # Fold BN scale into fc1 weight (f32), then cast to bf16.
    w1_folded = (w1 * scale[None, :]).astype(jnp.bfloat16)
    bn_shift = shift.reshape(1, HIDDEN)

    # Concatenate the two heads -> one 256-wide matmul.
    w_heads = jnp.concatenate([wmu, wvar], axis=1).astype(jnp.bfloat16)
    b_heads = jnp.zeros((1, 2 * z_size), jnp.float32)   # PyTorch biases init to 0

    return (w1_folded, bn_shift, w_heads, b_heads)


def cognitive_encoder_forward(x, params, *, max_tile=512, min_grid_steps=2):
    """x: (B, input_size) f32  ->  (mu, logvar), each (B, Z_SIZE) f32."""
    w1, bn_shift, w_heads, b_heads = params
    B, in_dim = x.shape

    # Batch tile: multiple of 16 (bf16 packs 16 rows / vreg), capped at
    # max_tile, and capped so the grid keeps >= min_grid_steps steps when the
    # batch allows (v7x megacore sharding of the "parallel" axis).
    tile = max(16, min(max_tile, _round_up(pl.cdiv(B, min_grid_steps), 16)))
    b_pad = _round_up(B, tile)
    if b_pad != B:
        x = jnp.pad(x, ((0, b_pad - B), (0, 0)))
    grid = (b_pad // tile,)

    def row_spec(shape):          # streams with the batch grid axis
        return pl.BlockSpec(shape, lambda i: (i, 0))

    def const_spec(shape):        # VMEM-resident, no re-DMA across steps
        return pl.BlockSpec(shape, lambda i: (0, 0))

    heads = pl.pallas_call(
        cognitive_encoder_kernel,
        out_shape=jax.ShapeDtypeStruct((b_pad, HEADS), jnp.float32),
        grid_spec=pltpu.PrefetchScalarGridSpec(
            num_scalar_prefetch=0,
            grid=grid,
            in_specs=[row_spec((tile, in_dim)),
                      const_spec(w1.shape),
                      const_spec(bn_shift.shape),
                      const_spec(w_heads.shape),
                      const_spec(b_heads.shape)],
            out_specs=row_spec((tile, HEADS))),
        compiler_params=pltpu.CompilerParams(
            dimension_semantics=("parallel",),
            vmem_limit_bytes=32 * 1024 * 1024),
    )(x, w1, bn_shift, w_heads, b_heads)

    # Padded rows hold garbage (ReLU(shift) @ W + b); slice them off here.
    return heads[:B, :Z_SIZE], heads[:B, Z_SIZE:]


def reference_forward(x, params):
    """Pure-JAX reference with the same bf16-input / f32-accumulate precision."""
    w1, bn_shift, w_heads, b_heads = params
    xb = x.astype(jnp.bfloat16)
    h = jnp.dot(xb, w1, preferred_element_type=jnp.float32)
    h = jnp.maximum(h + bn_shift, 0.0)
    heads = jnp.dot(h.astype(jnp.bfloat16), w_heads,
                    preferred_element_type=jnp.float32) + b_heads
    return heads[:, :Z_SIZE], heads[:, Z_SIZE:]


if __name__ == "__main__":
    key = jax.random.PRNGKey(0)
    kx, kp = jax.random.split(key)

    B = 8
    INPUT_SIZE = 256
    x = jax.random.normal(kx, (B, INPUT_SIZE), dtype=jnp.float32)
    params = init_params(kp, INPUT_SIZE)

    mu, logvar = cognitive_encoder_forward(x, params)
    mu = jax.block_until_ready(mu)
    logvar = jax.block_until_ready(logvar)

    ref_mu, ref_logvar = reference_forward(x, params)

    assert mu.shape == (B, Z_SIZE), mu.shape
    assert logvar.shape == (B, Z_SIZE), logvar.shape
    assert jnp.allclose(mu, ref_mu, atol=2e-3, rtol=2e-3), "mu mismatch vs reference"
    assert jnp.allclose(logvar, ref_logvar, atol=2e-3, rtol=2e-3), "logvar mismatch vs reference"

    print("KERNEL_OK")
</pallas_src>

<mosaic_0001>
module attributes {stable_mosaic.version = 11 : i64} {
  func.func @cognitive_encoder_kernel(%arg0: i32, %arg1: memref<16x256xf32, #tpu.memory_space<vmem>>, %arg2: memref<256x1024xbf16, #tpu.memory_space<vmem>>, %arg3: memref<1x1024xf32, #tpu.memory_space<vmem>>, %arg4: memref<1024x256xbf16, #tpu.memory_space<vmem>>, %arg5: memref<1x256xf32, #tpu.memory_space<vmem>>, %arg6: memref<16x256xf32, #tpu.memory_space<vmem>>) attributes {dimension_semantics = [#tpu.dimension_semantics<parallel>], iteration_bounds = array<i64: 1>, scalar_prefetch = 0 : i64, scratch_operands = 0 : i64, tpu.core_type = #tpu.core_type<tc>, window_params = [{transform_indices = @transform_0, window_bounds = array<i64: 16, 256>}, {pipeline_mode = #tpu.pipeline_mode<synchronous>, transform_indices = @transform_1, window_bounds = array<i64: 256, 1024>}, {pipeline_mode = #tpu.pipeline_mode<synchronous>, transform_indices = @transform_2, window_bounds = array<i64: 1, 1024>}, {pipeline_mode = #tpu.pipeline_mode<synchronous>, transform_indices = @transform_3, window_bounds = array<i64: 1024, 256>}, {pipeline_mode = #tpu.pipeline_mode<synchronous>, transform_indices = @transform_4, window_bounds = array<i64: 1, 256>}, {transform_indices = @transform_5, window_bounds = array<i64: 16, 256>}]} {
    %c0 = arith.constant 0 : index
    %c0_0 = arith.constant 0 : index
    %0 = vector.load %arg1[%c0, %c0_0] : memref<16x256xf32, #tpu.memory_space<vmem>>, vector<16x256xf32>
    %1 = arith.truncf %0 : vector<16x256xf32> to vector<16x256xbf16>
    %cst = arith.constant 0.000000e+00 : f32
    %2 = vector.broadcast %cst : f32 to vector<16x256xf32>
    %c0_1 = arith.constant 0 : index
    %c0_2 = arith.constant 0 : index
    %3 = vector.load %arg2[%c0_1, %c0_2] : memref<256x1024xbf16, #tpu.memory_space<vmem>>, vector<256x256xbf16>
    %cst_3 = arith.constant dense<0.000000e+00> : vector<16x256xf32>
    %4 = tpu.matmul %1, %3, %cst_3 {dimension_numbers = #tpu.dot_dimension_numbers<[1], [0], [0], [1], [0, 0, 1, 1], [], []>} : vector<16x256xbf16>, vector<256x256xbf16>, vector<16x256xf32> -> vector<16x256xf32>
    %c0_4 = arith.constant 0 : index
    %c0_5 = arith.constant 0 : index
    %5 = vector.load %arg3[%c0_4, %c0_5] : memref<1x1024xf32, #tpu.memory_space<vmem>>, vector<1x256xf32>
    %6 = vector.broadcast %5 : vector<1x256xf32> to vector<16x256xf32>
    %7 = arith.addf %4, %6 : vector<16x256xf32>
    %cst_6 = arith.constant 0.000000e+00 : f32
    %8 = vector.broadcast %cst_6 : f32 to vector<16x256xf32>
    %9 = arith.maximumf %7, %8 : vector<16x256xf32>
    %10 = arith.truncf %9 : vector<16x256xf32> to vector<16x256xbf16>
    %c0_7 = arith.constant 0 : index
    %c0_8 = arith.constant 0 : index
    %11 = vector.load %arg4[%c0_7, %c0_8] : memref<1024x256xbf16, #tpu.memory_space<vmem>>, vector<256x256xbf16>
    %cst_9 = arith.constant dense<0.000000e+00> : vector<16x256xf32>
    %12 = tpu.matmul %10, %11, %cst_9 {dimension_numbers = #tpu.dot_dimension_numbers<[1], [0], [0], [1], [0, 0, 1, 1], [], []>} : vector<16x256xbf16>, vector<256x256xbf16>, vector<16x256xf32> -> vector<16x256xf32>
    %13 = arith.addf %2, %12 : vector<16x256xf32>
    %c0_10 = arith.constant 0 : index
    %c256 = arith.constant 256 : index
    %14 = vector.load %arg2[%c0_10, %c256] : memref<256x1024xbf16, #tpu.memory_space<vmem>>, vector<256x256xbf16>
    %cst_11 = arith.constant dense<0.000000e+00> : vector<16x256xf32>
    %15 = tpu.matmul %1, %14, %cst_11 {dimension_numbers = #tpu.dot_dimension_numbers<[1], [0], [0], [1], [0, 0, 1, 1], [], []>} : vector<16x256xbf16>, vector<256x256xbf16>, vector<16x256xf32> -> vector<16x256xf32>
    %c0_12 = arith.constant 0 : index
    %c256_13 = arith.constant 256 : index
    %16 = vector.load %arg3[%c0_12, %c256_13] : memref<1x1024xf32, #tpu.memory_space<vmem>>, vector<1x256xf32>
    %17 = vector.broadcast %16 : vector<1x256xf32> to vector<16x256xf32>
    %18 = arith.addf %15, %17 : vector<16x256xf32>
    %cst_14 = arith.constant 0.000000e+00 : f32
    %19 = vector.broadcast %cst_14 : f32 to vector<16x256xf32>
    %20 = arith.maximumf %18, %19 : vector<16x256xf32>
    %21 = arith.truncf %20 : vector<16x256xf32> to vector<16x256xbf16>
    %c256_15 = arith.constant 256 : index
    %c0_16 = arith.constant 0 : index
    %22 = vector.load %arg4[%c256_15, %c0_16] : memref<1024x256xbf16, #tpu.memory_space<vmem>>, vector<256x256xbf16>
    %cst_17 = arith.constant dense<0.000000e+00> : vector<16x256xf32>
    %23 = tpu.matmul %21, %22, %cst_17 {dimension_numbers = #tpu.dot_dimension_numbers<[1], [0], [0], [1], [0, 0, 1, 1], [], []>} : vector<16x256xbf16>, vector<256x256xbf16>, vector<16x256xf32> -> vector<16x256xf32>
    %24 = arith.addf %13, %23 : vector<16x256xf32>
    %c0_18 = arith.constant 0 : index
    %c512 = arith.constant 512 : index
    %25 = vector.load %arg2[%c0_18, %c512] : memref<256x1024xbf16, #tpu.memory_space<vmem>>, vector<256x256xbf16>
    %cst_19 = arith.constant dense<0.000000e+00> : vector<16x256xf32>
    %26 = tpu.matmul %1, %25, %cst_19 {dimension_numbers = #tpu.dot_dimension_numbers<[1], [0], [0], [1], [0, 0, 1, 1], [], []>} : vector<16x256xbf16>, vector<256x256xbf16>, vector<16x256xf32> -> vector<16x256xf32>
    %c0_20 = arith.constant 0 : index
    %c512_21 = arith.constant 512 : index
    %27 = vector.load %arg3[%c0_20, %c512_21] : memref<1x1024xf32, #tpu.memory_space<vmem>>, vector<1x256xf32>
    %28 = vector.broadcast %27 : vector<1x256xf32> to vector<16x256xf32>
    %29 = arith.addf %26, %28 : vector<16x256xf32>
    %cst_22 = arith.constant 0.000000e+00 : f32
    %30 = vector.broadcast %cst_22 : f32 to vector<16x256xf32>
    %31 = arith.maximumf %29, %30 : vector<16x256xf32>
    %32 = arith.truncf %31 : vector<16x256xf32> to vector<16x256xbf16>
    %c512_23 = arith.constant 512 : index
    %c0_24 = arith.constant 0 : index
    %33 = vector.load %arg4[%c512_23, %c0_24] : memref<1024x256xbf16, #tpu.memory_space<vmem>>, vector<256x256xbf16>
    %cst_25 = arith.constant dense<0.000000e+00> : vector<16x256xf32>
    %34 = tpu.matmul %32, %33, %cst_25 {dimension_numbers = #tpu.dot_dimension_numbers<[1], [0], [0], [1], [0, 0, 1, 1], [], []>} : vector<16x256xbf16>, vector<256x256xbf16>, vector<16x256xf32> -> vector<16x256xf32>
    %35 = arith.addf %24, %34 : vector<16x256xf32>
    %c0_26 = arith.constant 0 : index
    %c768 = arith.constant 768 : index
    %36 = vector.load %arg2[%c0_26, %c768] : memref<256x1024xbf16, #tpu.memory_space<vmem>>, vector<256x256xbf16>
    %cst_27 = arith.constant dense<0.000000e+00> : vector<16x256xf32>
    %37 = tpu.matmul %1, %36, %cst_27 {dimension_numbers = #tpu.dot_dimension_numbers<[1], [0], [0], [1], [0, 0, 1, 1], [], []>} : vector<16x256xbf16>, vector<256x256xbf16>, vector<16x256xf32> -> vector<16x256xf32>
    %c0_28 = arith.constant 0 : index
    %c768_29 = arith.constant 768 : index
    %38 = vector.load %arg3[%c0_28, %c768_29] : memref<1x1024xf32, #tpu.memory_space<vmem>>, vector<1x256xf32>
    %39 = vector.broadcast %38 : vector<1x256xf32> to vector<16x256xf32>
    %40 = arith.addf %37, %39 : vector<16x256xf32>
    %cst_30 = arith.constant 0.000000e+00 : f32
    %41 = vector.broadcast %cst_30 : f32 to vector<16x256xf32>
    %42 = arith.maximumf %40, %41 : vector<16x256xf32>
    %43 = arith.truncf %42 : vector<16x256xf32> to vector<16x256xbf16>
    %c768_31 = arith.constant 768 : index
    %c0_32 = arith.constant 0 : index
    %44 = vector.load %arg4[%c768_31, %c0_32] : memref<1024x256xbf16, #tpu.memory_space<vmem>>, vector<256x256xbf16>
    %cst_33 = arith.constant dense<0.000000e+00> : vector<16x256xf32>
    %45 = tpu.matmul %43, %44, %cst_33 {dimension_numbers = #tpu.dot_dimension_numbers<[1], [0], [0], [1], [0, 0, 1, 1], [], []>} : vector<16x256xbf16>, vector<256x256xbf16>, vector<16x256xf32> -> vector<16x256xf32>
    %46 = arith.addf %35, %45 : vector<16x256xf32>
    %c0_34 = arith.constant 0 : index
    %c0_35 = arith.constant 0 : index
    %47 = vector.load %arg5[%c0_34, %c0_35] : memref<1x256xf32, #tpu.memory_space<vmem>>, vector<1x256xf32>
    %48 = vector.broadcast %47 : vector<1x256xf32> to vector<16x256xf32>
    %49 = arith.addf %46, %48 : vector<16x256xf32>
    %c0_36 = arith.constant 0 : index
    %c0_37 = arith.constant 0 : index
    %50 = vector.load %arg6[%c0_36, %c0_37] : memref<16x256xf32, #tpu.memory_space<vmem>>, vector<16x256xf32>
    tpu.vector_store %arg6[%c0_36, %c0_37], %49 {strides = array<i32>} : memref<16x256xf32, #tpu.memory_space<vmem>>, vector<16x256xf32>,
    return
  }
  func.func @transform_0(%arg0: i32) -> (i32, i32) {
    %c0_i32 = arith.constant 0 : i32
    %c0_i32_0 = arith.constant 0 : i32
    return %arg0, %c0_i32 : i32, i32
  }
  func.func @transform_1(%arg0: i32) -> (i32, i32) {
    %c0_i32 = arith.constant 0 : i32
    %c0_i32_0 = arith.constant 0 : i32
    %c0_i32_1 = arith.constant 0 : i32
    return %c0_i32, %c0_i32_0 : i32, i32
  }
  func.func @transform_2(%arg0: i32) -> (i32, i32) {
    %c0_i32 = arith.constant 0 : i32
    %c0_i32_0 = arith.constant 0 : i32
    %c0_i32_1 = arith.constant 0 : i32
    return %c0_i32, %c0_i32_0 : i32, i32
  }
  func.func @transform_3(%arg0: i32) -> (i32, i32) {
    %c0_i32 = arith.constant 0 : i32
    %c0_i32_0 = arith.constant 0 : i32
    %c0_i32_1 = arith.constant 0 : i32
    return %c0_i32, %c0_i32_0 : i32, i32
  }
  func.func @transform_4(%arg0: i32) -> (i32, i32) {
    %c0_i32 = arith.constant 0 : i32
    %c0_i32_0 = arith.constant 0 : i32
    %c0_i32_1 = arith.constant 0 : i32
    return %c0_i32, %c0_i32_0 : i32, i32
  }
  func.func @transform_5(%arg0: i32) -> (i32, i32) {
    %c0_i32 = arith.constant 0 : i32
    %c0_i32_0 = arith.constant 0 : i32
    return %arg0, %c0_i32 : i32, i32
  }
}

</mosaic_0001>

<llo_original>
// kernel: tpu_custom_call.1
$region0: #{tpu_custom_call.1}
  #allocation0 [shape = 'u32[]', space=smem, size = 0x4, offset = 0x4, fixed_abs, tag = 'smem constant byte address 0x4 - core index']
  #allocation1 [shape = 'u32[144,128]{1,0:T(1,128)}', space=vmem, size = 0x12000, scoped, tag = 'internal scratch']
  %s0 = inlined_call_operand.hbm [shape: f32[16,256], index: 0, kind: input, shape index: {}]
  %s1 = inlined_call_operand.hbm [shape: bf16[256,1024], index: 1, kind: input, shape index: {}]
  %s2 = inlined_call_operand.hbm [shape: f32[1,1024], index: 2, kind: input, shape index: {}]
  %s3 = inlined_call_operand.hbm [shape: bf16[1024,256], index: 3, kind: input, shape index: {}]
  %s4 = inlined_call_operand.vmem [shape: f32[1,256], index: 4, kind: input, shape index: {}]
  %s5 = inlined_call_operand.hbm [shape: f32[16,256], index: 5, kind: output, shape index: {}]
  %s6 = sld [smem:[#allocation0]]
  $region46: #{tpu_custom_call.1} parent=0
    _
  %s8 = ssub.s32 1, %s6
  %s9 = scalar_select 0, %s8, %s6
  $region1: #{tpu_custom_call.1} parent=0
    #allocation2 [shape = 'u8[16384]{0}', space=vmem, size = 0x4000, scoped, tag = 'input window, operand 0, single buffered']
    #allocation3 [shape = 's32[1]{0}', space=sflag, size = 0x4, scoped, tag = 'scoped memory for tpu_custom_call.1']
    #allocation4 [shape = 's32[1]{0}', space=sflag, size = 0x4, scoped, tag = 'scoped memory for tpu_custom_call.1']
    #allocation5 [shape = 'u8[524288]{0}', space=vmem, size = 0x80000, scoped, tag = 'input window, operand 1, single buffered']
    #allocation6 [shape = 's32[1]{0}', space=sflag, size = 0x4, scoped, tag = 'scoped memory for tpu_custom_call.1']
    #allocation7 [shape = 'u8[4096]{0}', space=vmem, size = 0x1000, scoped, tag = 'input window, operand 2, single buffered']
    #allocation8 [shape = 'u8[524288]{0}', space=vmem, size = 0x80000, scoped, tag = 'input window, operand 3, single buffered']
    #allocation9 [shape = 's32[1]{0}', space=sflag, size = 0x4, scoped, tag = 'scoped memory for tpu_custom_call.1']
    #allocation10 [shape = 'u8[16384]{0}', space=vmem, size = 0x4000, scoped, tag = 'output window, operand 0, single buffered']
    %10 = vsyncpa [#allocation3], 0
    %11 = vsyncpa [#allocation6], 0
    %12 = vsyncpa [#allocation9], 0
    %13 = vsyncpa [#allocation4], 0
    // Predicated region
    $region2: #{tpu_custom_call.1} parent=1 // pred_check
      _
    $region3: #{tpu_custom_call.1} parent=1 // pred_check_branch
      %15 = sbr.rel (0) target = $region5
    $region4: #{tpu_custom_call.1} parent=1 // pred_region
      %s17 = ssub.s32 512, 512
      %18 = vsyncadd [#allocation3], %s17
      %s19 = sshll.u32 [#allocation2], 4
      %s20 = int_to_ptr.vmem [resolvable:$true] %s19
      %25 = dma.hbm_to_vmem [thread:$0]  %s0, 512, %s20, [#allocation3], 256, 256, 16
    $region5: #{tpu_custom_call.1} parent=1 // pred_fallthru
      _
    // Predicated region
    $region6: #{tpu_custom_call.1} parent=1 // pred_check
      _
    $region7: #{tpu_custom_call.1} parent=1 // pred_check_branch
      %27 = sbr.rel (0) target = $region9
    $region8: #{tpu_custom_call.1} parent=1 // pred_region
      %s29 = ssub.s32 16384, 16384
      %30 = vsyncadd [#allocation6], %s29
      %s31 = sshll.u32 [#allocation5], 4
      %s32 = int_to_ptr.vmem [resolvable:$true] %s31
      %37 = dma.hbm_to_vmem [thread:$0]  %s1, 16384, %s32, [#allocation6], 512, 512, 32
    $region9: #{tpu_custom_call.1} parent=1 // pred_fallthru
      _
    // Predicated region
    $region10: #{tpu_custom_call.1} parent=1 // pred_check
      _
    $region11: #{tpu_custom_call.1} parent=1 // pred_check_branch
      %39 = sbr.rel (0) target = $region13
    $region12: #{tpu_custom_call.1} parent=1 // pred_region
      %s41 = ssub.s32 128, 128
      %42 = vsyncadd [#allocation6], %s41
      %s44 = sshll.u32 [#allocation7], 4
      %s45 = int_to_ptr.vmem [resolvable:$true] %s44
      %47 = dma.hbm_to_vmem [thread:$0]  %s2, 128, %s45, [#allocation6]
    $region13: #{tpu_custom_call.1} parent=1 // pred_fallthru
      _
    // Predicated region
    $region14: #{tpu_custom_call.1} parent=1 // pred_check
      _
    $region15: #{tpu_custom_call.1} parent=1 // pred_check_branch
      %49 = sbr.rel (0) target = $region17
    $region16: #{tpu_custom_call.1} parent=1 // pred_region
      %s51 = ssub.s32 16384, 16384
      %52 = vsyncadd [#allocation9], %s51
      %s53 = sshll.u32 [#allocation8], 4
      %s54 = int_to_ptr.vmem [resolvable:$true] %s53
      %59 = dma.hbm_to_vmem [thread:$0]  %s3, 16384, %s54, [#allocation9], 128, 128, 8
    $region17: #{tpu_custom_call.1} parent=1 // pred_fallthru
      _
    // Predicated region
    $region18: #{tpu_custom_call.1} parent=1 // pred_check
      _
    $region19: #{tpu_custom_call.1} parent=1 // pred_check_branch
      %61 = sbr.rel (0) target = $region21
    $region20: #{tpu_custom_call.1} parent=1 // pred_region
      _
    $region21: #{tpu_custom_call.1} parent=1 // pred_fallthru
      _
    // Predicated region
    $region22: #{tpu_custom_call.1} parent=1 // pred_check
      _
    $region23: #{tpu_custom_call.1} parent=1 // pred_check_branch
      %63 = sbr.rel (0) target = $region25
    $region24: #{tpu_custom_call.1} parent=1 // pred_region
      %64 = dma.done [#allocation3], 512
    $region25: #{tpu_custom_call.1} parent=1 // pred_fallthru
      _
    // Predicated region
    $region26: #{tpu_custom_call.1} parent=1 // pred_check
      _
    $region27: #{tpu_custom_call.1} parent=1 // pred_check_branch
      %66 = sbr.rel (0) target = $region29
    $region28: #{tpu_custom_call.1} parent=1 // pred_region
      %67 = dma.done [#allocation6], 16384
    $region29: #{tpu_custom_call.1} parent=1 // pred_fallthru
      _
    // Predicated region
    $region30: #{tpu_custom_call.1} parent=1 // pred_check
      _
    $region31: #{tpu_custom_call.1} parent=1 // pred_check_branch
      %69 = sbr.rel (0) target = $region33
    $region32: #{tpu_custom_call.1} parent=1 // pred_region
      %70 = dma.done [#allocation6], 128
    $region33: #{tpu_custom_call.1} parent=1 // pred_fallthru
      _
    // Predicated region
    $region34: #{tpu_custom_call.1} parent=1 // pred_check
      _
    $region35: #{tpu_custom_call.1} parent=1 // pred_check_branch
      %72 = sbr.rel (0) target = $region37
    $region36: #{tpu_custom_call.1} parent=1 // pred_region
      %73 = dma.done [#allocation9], 16384
    $region37: #{tpu_custom_call.1} parent=1 // pred_fallthru
      _
    %v74 = vld [vmem:[#allocation2] sm:$0xff]
    %v75 = vld [vmem:[#allocation2 + $0x8] sm:$0xff]
    %v76 = vld [vmem:[#allocation2 + $0x10] sm:$0xff]
    %v77 = vld [vmem:[#allocation2 + $0x18] sm:$0xff]
    %v78 = vpack.c.bf16 %v76, %v74
    %v79 = vpack.c.bf16 %v77, %v75
    %v80 = vld [vmem:[#allocation5] sm:$0xff]
    %v81 = vld [vmem:[#allocation5 + $0x20] sm:$0xff]
    %v82 = vld [vmem:[#allocation5 + $0x40] sm:$0xff]
    %v83 = vld [vmem:[#allocation5 + $0x60] sm:$0xff]
    %v84 = vld [vmem:[#allocation5 + $0x80] sm:$0xff]
    %v85 = vld [vmem:[#allocation5 + $0xa0] sm:$0xff]
    %v86 = vld [vmem:[#allocation5 + $0xc0] sm:$0xff]
    %v87 = vld [vmem:[#allocation5 + $0xe0] sm:$0xff]
    %v88 = vld [vmem:[#allocation5 + $0x100] sm:$0xff]
    %v89 = vld [vmem:[#allocation5 + $0x120] sm:$0xff]
    %v90 = vld [vmem:[#allocation5 + $0x140] sm:$0xff]
    %v91 = vld [vmem:[#allocation5 + $0x160] sm:$0xff]
    %v92 = vld [vmem:[#allocation5 + $0x180] sm:$0xff]
    %v93 = vld [vmem:[#allocation5 + $0x1a0] sm:$0xff]
    %v94 = vld [vmem:[#allocation5 + $0x1c0] sm:$0xff]
    %v95 = vld [vmem:[#allocation5 + $0x1e0] sm:$0xff]
    %v96 = vld [vmem:[#allocation5 + $0x200] sm:$0xff]
    %v97 = vld [vmem:[#allocation5 + $0x220] sm:$0xff]
    %v98 = vld [vmem:[#allocation5 + $0x240] sm:$0xff]
    %v99 = vld [vmem:[#allocation5 + $0x260] sm:$0xff]
    %v100 = vld [vmem:[#allocation5 + $0x280] sm:$0xff]
    %v101 = vld [vmem:[#allocation5 + $0x2a0] sm:$0xff]
    %v102 = vld [vmem:[#allocation5 + $0x2c0] sm:$0xff]
    %v103 = vld [vmem:[#allocation5 + $0x2e0] sm:$0xff]
    %v104 = vld [vmem:[#allocation5 + $0x300] sm:$0xff]
    %v105 = vld [vmem:[#allocation5 + $0x320] sm:$0xff]
    %v106 = vld [vmem:[#allocation5 + $0x340] sm:$0xff]
    %v107 = vld [vmem:[#allocation5 + $0x360] sm:$0xff]
    %v108 = vld [vmem:[#allocation5 + $0x380] sm:$0xff]
    %v109 = vld [vmem:[#allocation5 + $0x3a0] sm:$0xff]
    %v110 = vld [vmem:[#allocation5 + $0x3c0] sm:$0xff]
    %v111 = vld [vmem:[#allocation5 + $0x3e0] sm:$0xff]
    %v112 = vld [vmem:[#allocation7] sm:$0x3]
    %v114 = vlaneseq
    %v115 = vshrl.u32 %v114, 7
    %v116 = vsub.s32 0, %v115
    %v117 = vrot.slane %v112, %v116
    %v118 = vlaneseq
    %v119 = vshrl.u32 %v118, 7
    %v120 = vsub.s32 1, %v119
    %v121 = vrot.slane %v112, %v120
    %v156 = vunpack.c.l.b16 %v80
    %v157 = vunpack.c.h.b16 %v80
    %v158 = vunpack.c.l.b16 %v81
    %v159 = vunpack.c.h.b16 %v81
    %v160 = vunpack.c.l.b16 %v82
    %v161 = vunpack.c.h.b16 %v82
    %v162 = vunpack.c.l.b16 %v83
    %v163 = vunpack.c.h.b16 %v83
    %v164 = vunpack.c.l.b16 %v84
    %v165 = vunpack.c.h.b16 %v84
    %v166 = vunpack.c.l.b16 %v85
    %v167 = vunpack.c.h.b16 %v85
    %v168 = vunpack.c.l.b16 %v86
    %v169 = vunpack.c.h.b16 %v86
    %v170 = vunpack.c.l.b16 %v87
    %v171 = vunpack.c.h.b16 %v87
    %v172 = vunpack.c.l.b16 %v88
    %v173 = vunpack.c.h.b16 %v88
    %v174 = vunpack.c.l.b16 %v89
    %v175 = vunpack.c.h.b16 %v89
    %v176 = vunpack.c.l.b16 %v90
    %v177 = vunpack.c.h.b16 %v90
    %v178 = vunpack.c.l.b16 %v91
    %v179 = vunpack.c.h.b16 %v91
    %v180 = vunpack.c.l.b16 %v92
    %v181 = vunpack.c.h.b16 %v92
    %v182 = vunpack.c.l.b16 %v93
    %v183 = vunpack.c.h.b16 %v93
    %v184 = vunpack.c.l.b16 %v94
    %v185 = vunpack.c.h.b16 %v94
    %v186 = vunpack.c.l.b16 %v95
    %v187 = vunpack.c.h.b16 %v95
    %v188 = vunpack.c.l.b16 %v96
    %v189 = vunpack.c.h.b16 %v96
    %v190 = vunpack.c.l.b16 %v97
    %v191 = vunpack.c.h.b16 %v97
    %v192 = vunpack.c.l.b16 %v98
    %v193 = vunpack.c.h.b16 %v98
    %v194 = vunpack.c.l.b16 %v99
    %v195 = vunpack.c.h.b16 %v99
    %v196 = vunpack.c.l.b16 %v100
    %v197 = vunpack.c.h.b16 %v100
    %v198 = vunpack.c.l.b16 %v101
    %v199 = vunpack.c.h.b16 %v101
    %v200 = vunpack.c.l.b16 %v102
    %v201 = vunpack.c.h.b16 %v102
    %v202 = vunpack.c.l.b16 %v103
    %v203 = vunpack.c.h.b16 %v103
    %v204 = vunpack.c.l.b16 %v104
    %v205 = vunpack.c.h.b16 %v104
    %v206 = vunpack.c.l.b16 %v105
    %v207 = vunpack.c.h.b16 %v105
    %v208 = vunpack.c.l.b16 %v106
    %v209 = vunpack.c.h.b16 %v106
    %v210 = vunpack.c.l.b16 %v107
    %v211 = vunpack.c.h.b16 %v107
    %v212 = vunpack.c.l.b16 %v108
    %v213 = vunpack.c.h.b16 %v108
    %v214 = vunpack.c.l.b16 %v109
    %v215 = vunpack.c.h.b16 %v109
    %v216 = vunpack.c.l.b16 %v110
    %v217 = vunpack.c.h.b16 %v110
    %v218 = vunpack.c.l.b16 %v111
    %v219 = vunpack.c.h.b16 %v111
    %v220 = vpack.c.b16 %v158, %v156
    %v221 = vpack.c.b16 %v159, %v157
    %v222 = vpack.c.b16 %v162, %v160
    %v223 = vpack.c.b16 %v163, %v161
    %v224 = vpack.c.b16 %v166, %v164
    %v225 = vpack.c.b16 %v167, %v165
    %v226 = vpack.c.b16 %v170, %v168
    %v227 = vpack.c.b16 %v171, %v169
    %v228 = vpack.c.b16 %v174, %v172
    %v229 = vpack.c.b16 %v175, %v173
    %v230 = vpack.c.b16 %v178, %v176
    %v231 = vpack.c.b16 %v179, %v177
    %v232 = vpack.c.b16 %v182, %v180
    %v233 = vpack.c.b16 %v183, %v181
    %v234 = vpack.c.b16 %v186, %v184
    %v235 = vpack.c.b16 %v187, %v185
    %v236 = vpack.c.b16 %v190, %v188
    %v237 = vpack.c.b16 %v191, %v189
    %v238 = vpack.c.b16 %v194, %v192
    %v239 = vpack.c.b16 %v195, %v193
    %v240 = vpack.c.b16 %v198, %v196
    %v241 = vpack.c.b16 %v199, %v197
    %v242 = vpack.c.b16 %v202, %v200
    %v243 = vpack.c.b16 %v203, %v201
    %v244 = vpack.c.b16 %v206, %v204
    %v245 = vpack.c.b16 %v207, %v205
    %v246 = vpack.c.b16 %v210, %v208
    %v247 = vpack.c.b16 %v211, %v209
    %v248 = vpack.c.b16 %v214, %v212
    %v249 = vpack.c.b16 %v215, %v213
    %v250 = vpack.c.b16 %v218, %v216
    %v251 = vpack.c.b16 %v219, %v217
    %284 = vmatprep.subr.bf16.mxu0 %v221
    %285 = vmatpush1.bf16.msra.mxu0 %v220
    %286 = vmatprep.subr.bf16.mxu0 %v223
    %287 = vmatpush1.bf16.msra.mxu0 %v222
    %288 = vmatprep.subr.bf16.mxu0 %v225
    %289 = vmatpush1.bf16.msra.mxu0 %v224
    %290 = vmatprep.subr.bf16.mxu0 %v227
    %291 = vmatpush1.bf16.msra.mxu0 %v226
    %292 = vmatprep.subr.bf16.mxu0 %v229
    %293 = vmatpush1.bf16.msra.mxu0 %v228
    %294 = vmatprep.subr.bf16.mxu0 %v231
    %295 = vmatpush1.bf16.msra.mxu0 %v230
    %296 = vmatprep.subr.bf16.mxu0 %v233
    %297 = vmatpush1.bf16.msra.mxu0 %v232
    %298 = vmatprep.subr.bf16.mxu0 %v235
    %299 = vmatpush1.bf16.msra.mxu0 %v234
    %300 = vmatprep.subr.bf16.mxu0 %v237
    %301 = vmatpush1.bf16.msra.mxu0 %v236
    %302 = vmatprep.subr.bf16.mxu0 %v239
    %303 = vmatpush1.bf16.msra.mxu0 %v238
    %304 = vmatprep.subr.bf16.mxu0 %v241
    %305 = vmatpush1.bf16.msra.mxu0 %v240
    %306 = vmatprep.subr.bf16.mxu0 %v243
    %307 = vmatpush1.bf16.msra.mxu0 %v242
    %308 = vmatprep.subr.bf16.mxu0 %v245
    %309 = vmatpush1.bf16.msra.mxu0 %v244
    %310 = vmatprep.subr.bf16.mxu0 %v247
    %311 = vmatpush1.bf16.msra.mxu0 %v246
    %312 = vmatprep.subr.bf16.mxu0 %v249
    %313 = vmatpush1.bf16.msra.mxu0 %v248
    %314 = vmatprep.subr.bf16.mxu0 %v251
    %315 = vmatpush1.bf16.msra.mxu0 %v250
    %316 = vmatprep.mubr.bf16.mxu0 %v79
    %317 = vmatmul.mubr.bf16.gmra.mrb[0].mxu0 %v78
    %v318 = vpop.f32.mrb[0].mxu0
    %v319 = vadd.f32 %v117, %v318
    %v320 = vpop.f32.mrb[0].mxu0
    %v321 = vadd.f32 %v121, %v320
    %v322 = vpop.f32.mrb[0].mxu0
    %v323 = vadd.f32 %v117, %v322
    %v324 = vpop.f32.mrb[0].mxu0
    %v325 = vadd.f32 %v121, %v324
    %326 = vdwg.mxu0
    %v327 = vmax.f32 %v319, 0.0
    %v328 = vmax.f32 %v321, 0.0
    %v329 = vmax.f32 %v323, 0.0
    %v330 = vmax.f32 %v325, 0.0
    %v331 = vpack.c.bf16 %v329, %v327
    %v332 = vpack.c.bf16 %v330, %v328
    %v333 = vld [vmem:[#allocation8] sm:$0xff]
    %v334 = vld [vmem:[#allocation8 + $0x8] sm:$0xff]
    %v335 = vld [vmem:[#allocation8 + $0x10] sm:$0xff]
    %v336 = vld [vmem:[#allocation8 + $0x18] sm:$0xff]
    %v337 = vld [vmem:[#allocation8 + $0x20] sm:$0xff]
    %v338 = vld [vmem:[#allocation8 + $0x28] sm:$0xff]
    %v339 = vld [vmem:[#allocation8 + $0x30] sm:$0xff]
    %v340 = vld [vmem:[#allocation8 + $0x38] sm:$0xff]
    %v341 = vld [vmem:[#allocation8 + $0x40] sm:$0xff]
    %v342 = vld [vmem:[#allocation8 + $0x48] sm:$0xff]
    %v343 = vld [vmem:[#allocation8 + $0x50] sm:$0xff]
    %v344 = vld [vmem:[#allocation8 + $0x58] sm:$0xff]
    %v345 = vld [vmem:[#allocation8 + $0x60] sm:$0xff]
    %v346 = vld [vmem:[#allocation8 + $0x68] sm:$0xff]
    %v347 = vld [vmem:[#allocation8 + $0x70] sm:$0xff]
    %v348 = vld [vmem:[#allocation8 + $0x78] sm:$0xff]
    %v349 = vld [vmem:[#allocation8 + $0x80] sm:$0xff]
    %v350 = vld [vmem:[#allocation8 + $0x88] sm:$0xff]
    %v351 = vld [vmem:[#allocation8 + $0x90] sm:$0xff]
    %v352 = vld [vmem:[#allocation8 + $0x98] sm:$0xff]
    %v353 = vld [vmem:[#allocation8 + $0xa0] sm:$0xff]
    %v354 = vld [vmem:[#allocation8 + $0xa8] sm:$0xff]
    %v355 = vld [vmem:[#allocation8 + $0xb0] sm:$0xff]
    %v356 = vld [vmem:[#allocation8 + $0xb8] sm:$0xff]
    %v357 = vld [vmem:[#allocation8 + $0xc0] sm:$0xff]
    %v358 = vld [vmem:[#allocation8 + $0xc8] sm:$0xff]
    %v359 = vld [vmem:[#allocation8 + $0xd0] sm:$0xff]
    %v360 = vld [vmem:[#allocation8 + $0xd8] sm:$0xff]
    %v361 = vld [vmem:[#allocation8 + $0xe0] sm:$0xff]
    %v362 = vld [vmem:[#allocation8 + $0xe8] sm:$0xff]
    %v363 = vld [vmem:[#allocation8 + $0xf0] sm:$0xff]
    %v364 = vld [vmem:[#allocation8 + $0xf8] sm:$0xff]
    %v365 = vld [vmem:[#allocation5 + $0x8] sm:$0xff]
    %v366 = vld [vmem:[#allocation5 + $0x28] sm:$0xff]
    %v367 = vld [vmem:[#allocation5 + $0x48] sm:$0xff]
    %v368 = vld [vmem:[#allocation5 + $0x68] sm:$0xff]
    %v369 = vld [vmem:[#allocation5 + $0x88] sm:$0xff]
    %v370 = vld [vmem:[#allocation5 + $0xa8] sm:$0xff]
    %v371 = vld [vmem:[#allocation5 + $0xc8] sm:$0xff]
    %v372 = vld [vmem:[#allocation5 + $0xe8] sm:$0xff]
    %v373 = vld [vmem:[#allocation5 + $0x108] sm:$0xff]
    %v374 = vld [vmem:[#allocation5 + $0x128] sm:$0xff]
    %v375 = vld [vmem:[#allocation5 + $0x148] sm:$0xff]
    %v376 = vld [vmem:[#allocation5 + $0x168] sm:$0xff]
    %v377 = vld [vmem:[#allocation5 + $0x188] sm:$0xff]
    %v378 = vld [vmem:[#allocation5 + $0x1a8] sm:$0xff]
    %v379 = vld [vmem:[#allocation5 + $0x1c8] sm:$0xff]
    %v380 = vld [vmem:[#allocation5 + $0x1e8] sm:$0xff]
    %v381 = vld [vmem:[#allocation5 + $0x208] sm:$0xff]
    %v382 = vld [vmem:[#allocation5 + $0x228] sm:$0xff]
    %v383 = vld [vmem:[#allocation5 + $0x248] sm:$0xff]
    %v384 = vld [vmem:[#allocation5 + $0x268] sm:$0xff]
    %v385 = vld [vmem:[#allocation5 + $0x288] sm:$0xff]
    %v386 = vld [vmem:[#allocation5 + $0x2a8] sm:$0xff]
    %v387 = vld [vmem:[#allocation5 + $0x2c8] sm:$0xff]
    %v388 = vld [vmem:[#allocation5 + $0x2e8] sm:$0xff]
    %v389 = vld [vmem:[#allocation5 + $0x308] sm:$0xff]
    %v390 = vld [vmem:[#allocation5 + $0x328] sm:$0xff]
    %v391 = vld [vmem:[#allocation5 + $0x348] sm:$0xff]
    %v392 = vld [vmem:[#allocation5 + $0x368] sm:$0xff]
    %v393 = vld [vmem:[#allocation5 + $0x388] sm:$0xff]
    %v394 = vld [vmem:[#allocation5 + $0x3a8] sm:$0xff]
    %v395 = vld [vmem:[#allocation5 + $0x3c8] sm:$0xff]
    %v396 = vld [vmem:[#allocation5 + $0x3e8] sm:$0xff]
    %v397 = vld [vmem:[#allocation7 + $0x2] sm:$0x3]
    %v399 = vlaneseq
    %v400 = vshrl.u32 %v399, 7
    %v401 = vsub.s32 0, %v400
    %v402 = vrot.slane %v397, %v401
    %v403 = vlaneseq
    %v404 = vshrl.u32 %v403, 7
    %v405 = vsub.s32 1, %v404
    %v406 = vrot.slane %v397, %v405
    %v441 = vunpack.c.l.b16 %v365
    %v442 = vunpack.c.h.b16 %v365
    %v443 = vunpack.c.l.b16 %v366
    %v444 = vunpack.c.h.b16 %v366
    %v445 = vunpack.c.l.b16 %v367
    %v446 = vunpack.c.h.b16 %v367
    %v447 = vunpack.c.l.b16 %v368
    %v448 = vunpack.c.h.b16 %v368
    %v449 = vunpack.c.l.b16 %v369
    %v450 = vunpack.c.h.b16 %v369
    %v451 = vunpack.c.l.b16 %v370
    %v452 = vunpack.c.h.b16 %v370
    %v453 = vunpack.c.l.b16 %v371
    %v454 = vunpack.c.h.b16 %v371
    %v455 = vunpack.c.l.b16 %v372
    %v456 = vunpack.c.h.b16 %v372
    %v457 = vunpack.c.l.b16 %v373
    %v458 = vunpack.c.h.b16 %v373
    %v459 = vunpack.c.l.b16 %v374
    %v460 = vunpack.c.h.b16 %v374
    %v461 = vunpack.c.l.b16 %v375
    %v462 = vunpack.c.h.b16 %v375
    %v463 = vunpack.c.l.b16 %v376
    %v464 = vunpack.c.h.b16 %v376
    %v465 = vunpack.c.l.b16 %v377
    %v466 = vunpack.c.h.b16 %v377
    %v467 = vunpack.c.l.b16 %v378
    %v468 = vunpack.c.h.b16 %v378
    %v469 = vunpack.c.l.b16 %v379
    %v470 = vunpack.c.h.b16 %v379
    %v471 = vunpack.c.l.b16 %v380
    %v472 = vunpack.c.h.b16 %v380
    %v473 = vunpack.c.l.b16 %v381
    %v474 = vunpack.c.h.b16 %v381
    %v475 = vunpack.c.l.b16 %v382
    %v476 = vunpack.c.h.b16 %v382
    %v477 = vunpack.c.l.b16 %v383
    %v478 = vunpack.c.h.b16 %v383
    %v479 = vunpack.c.l.b16 %v384
    %v480 = vunpack.c.h.b16 %v384
    %v481 = vunpack.c.l.b16 %v385
    %v482 = vunpack.c.h.b16 %v385
    %v483 = vunpack.c.l.b16 %v386
    %v484 = vunpack.c.h.b16 %v386
    %v485 = vunpack.c.l.b16 %v387
    %v486 = vunpack.c.h.b16 %v387
    %v487 = vunpack.c.l.b16 %v388
    %v488 = vunpack.c.h.b16 %v388
    %v489 = vunpack.c.l.b16 %v389
    %v490 = vunpack.c.h.b16 %v389
    %v491 = vunpack.c.l.b16 %v390
    %v492 = vunpack.c.h.b16 %v390
    %v493 = vunpack.c.l.b16 %v391
    %v494 = vunpack.c.h.b16 %v391
    %v495 = vunpack.c.l.b16 %v392
    %v496 = vunpack.c.h.b16 %v392
    %v497 = vunpack.c.l.b16 %v393
    %v498 = vunpack.c.h.b16 %v393
    %v499 = vunpack.c.l.b16 %v394
    %v500 = vunpack.c.h.b16 %v394
    %v501 = vunpack.c.l.b16 %v395
    %v502 = vunpack.c.h.b16 %v395
    %v503 = vunpack.c.l.b16 %v396
    %v504 = vunpack.c.h.b16 %v396
    %v505 = vpack.c.b16 %v443, %v441
    %v506 = vpack.c.b16 %v444, %v442
    %v507 = vpack.c.b16 %v447, %v445
    %v508 = vpack.c.b16 %v448, %v446
    %v509 = vpack.c.b16 %v451, %v449
    %v510 = vpack.c.b16 %v452, %v450
    %v511 = vpack.c.b16 %v455, %v453
    %v512 = vpack.c.b16 %v456, %v454
    %v513 = vpack.c.b16 %v459, %v457
    %v514 = vpack.c.b16 %v460, %v458
    %v515 = vpack.c.b16 %v463, %v461
    %v516 = vpack.c.b16 %v464, %v462
    %v517 = vpack.c.b16 %v467, %v465
    %v518 = vpack.c.b16 %v468, %v466
    %v519 = vpack.c.b16 %v471, %v469
    %v520 = vpack.c.b16 %v472, %v470
    %v521 = vpack.c.b16 %v475, %v473
    %v522 = vpack.c.b16 %v476, %v474
    %v523 = vpack.c.b16 %v479, %v477
    %v524 = vpack.c.b16 %v480, %v478
    %v525 = vpack.c.b16 %v483, %v481
    %v526 = vpack.c.b16 %v484, %v482
    %v527 = vpack.c.b16 %v487, %v485
    %v528 = vpack.c.b16 %v488, %v486
    %v529 = vpack.c.b16 %v491, %v489
    %v530 = vpack.c.b16 %v492, %v490
    %v531 = vpack.c.b16 %v495, %v493
    %v532 = vpack.c.b16 %v496, %v494
    %v533 = vpack.c.b16 %v499, %v497
    %v534 = vpack.c.b16 %v500, %v498
    %v535 = vpack.c.b16 %v503, %v501
    %v536 = vpack.c.b16 %v504, %v502
    %569 = vmatprep.subr.bf16.mxu0 %v506
    %570 = vmatpush1.bf16.msra.mxu0 %v505
    %571 = vmatprep.subr.bf16.mxu0 %v508
    %572 = vmatpush1.bf16.msra.mxu0 %v507
    %573 = vmatprep.subr.bf16.mxu0 %v510
    %574 = vmatpush1.bf16.msra.mxu0 %v509
    %575 = vmatprep.subr.bf16.mxu0 %v512
    %576 = vmatpush1.bf16.msra.mxu0 %v511
    %577 = vmatprep.subr.bf16.mxu0 %v514
    %578 = vmatpush1.bf16.msra.mxu0 %v513
    %579 = vmatprep.subr.bf16.mxu0 %v516
    %580 = vmatpush1.bf16.msra.mxu0 %v515
    %581 = vmatprep.subr.bf16.mxu0 %v518
    %582 = vmatpush1.bf16.msra.mxu0 %v517
    %583 = vmatprep.subr.bf16.mxu0 %v520
    %584 = vmatpush1.bf16.msra.mxu0 %v519
    %585 = vmatprep.subr.bf16.mxu0 %v522
    %586 = vmatpush1.bf16.msra.mxu0 %v521
    %587 = vmatprep.subr.bf16.mxu0 %v524
    %588 = vmatpush1.bf16.msra.mxu0 %v523
    %589 = vmatprep.subr.bf16.mxu0 %v526
    %590 = vmatpush1.bf16.msra.mxu0 %v525
    %591 = vmatprep.subr.bf16.mxu0 %v528
    %592 = vmatpush1.bf16.msra.mxu0 %v527
    %593 = vmatprep.subr.bf16.mxu0 %v530
    %594 = vmatpush1.bf16.msra.mxu0 %v529
    %595 = vmatprep.subr.bf16.mxu0 %v532
    %596 = vmatpush1.bf16.msra.mxu0 %v531
    %597 = vmatprep.subr.bf16.mxu0 %v534
    %598 = vmatpush1.bf16.msra.mxu0 %v533
    %599 = vmatprep.subr.bf16.mxu0 %v536
    %600 = vmatpush1.bf16.msra.mxu0 %v535
    %601 = vmatprep.mubr.bf16.mxu0 %v79
    %602 = vmatmul.mubr.bf16.gmra.mrb[0].mxu0 %v78
    %v603 = vpop.f32.mrb[0].mxu0
    %v604 = vadd.f32 %v402, %v603
    %v605 = vpop.f32.mrb[0].mxu0
    %v606 = vadd.f32 %v406, %v605
    %v607 = vpop.f32.mrb[0].mxu0
    %v608 = vadd.f32 %v402, %v607
    %v609 = vpop.f32.mrb[0].mxu0
    %v610 = vadd.f32 %v406, %v609
    %611 = vdwg.mxu0
    %v612 = vmax.f32 %v604, 0.0
    %v613 = vmax.f32 %v606, 0.0
    %v614 = vmax.f32 %v608, 0.0
    %v615 = vmax.f32 %v610, 0.0
    %v616 = vpack.c.bf16 %v614, %v612
    %v617 = vpack.c.bf16 %v615, %v613
    %v618 = vld [vmem:[#allocation8 + $0x100] sm:$0xff]
    %v619 = vld [vmem:[#allocation8 + $0x108] sm:$0xff]
    %v620 = vld [vmem:[#allocation8 + $0x110] sm:$0xff]
    %v621 = vld [vmem:[#allocation8 + $0x118] sm:$0xff]
    %v622 = vld [vmem:[#allocation8 + $0x120] sm:$0xff]
    %v623 = vld [vmem:[#allocation8 + $0x128] sm:$0xff]
    %v624 = vld [vmem:[#allocation8 + $0x130] sm:$0xff]
    %v625 = vld [vmem:[#allocation8 + $0x138] sm:$0xff]
    %v626 = vld [vmem:[#allocation8 + $0x140] sm:$0xff]
    %v627 = vld [vmem:[#allocation8 + $0x148] sm:$0xff]
    %v628 = vld [vmem:[#allocation8 + $0x150] sm:$0xff]
    %v629 = vld [vmem:[#allocation8 + $0x158] sm:$0xff]
    %v630 = vld [vmem:[#allocation8 + $0x160] sm:$0xff]
    %v631 = vld [vmem:[#allocation8 + $0x168] sm:$0xff]
    %v632 = vld [vmem:[#allocation8 + $0x170] sm:$0xff]
    %v633 = vld [vmem:[#allocation8 + $0x178] sm:$0xff]
    %v634 = vld [vmem:[#allocation8 + $0x180] sm:$0xff]
    %v635 = vld [vmem:[#allocation8 + $0x188] sm:$0xff]
    %v636 = vld [vmem:[#allocation8 + $0x190] sm:$0xff]
    %v637 = vld [vmem:[#allocation8 + $0x198] sm:$0xff]
    %v638 = vld [vmem:[#allocation8 + $0x1a0] sm:$0xff]
    %v639 = vld [vmem:[#allocation8 + $0x1a8] sm:$0xff]
    %v640 = vld [vmem:[#allocation8 + $0x1b0] sm:$0xff]
    %v641 = vld [vmem:[#allocation8 + $0x1b8] sm:$0xff]
    %v642 = vld [vmem:[#allocation8 + $0x1c0] sm:$0xff]
    %v643 = vld [vmem:[#allocation8 + $0x1c8] sm:$0xff]
    %v644 = vld [vmem:[#allocation8 + $0x1d0] sm:$0xff]
    %v645 = vld [vmem:[#allocation8 + $0x1d8] sm:$0xff]
    %v646 = vld [vmem:[#allocation8 + $0x1e0] sm:$0xff]
    %v647 = vld [vmem:[#allocation8 + $0x1e8] sm:$0xff]
    %v648 = vld [vmem:[#allocation8 + $0x1f0] sm:$0xff]
    %v649 = vld [vmem:[#allocation8 + $0x1f8] sm:$0xff]
    %v682 = vunpack.c.l.b16 %v618
    %v683 = vunpack.c.h.b16 %v618
    %v684 = vunpack.c.l.b16 %v619
    %v685 = vunpack.c.h.b16 %v619
    %v686 = vunpack.c.l.b16 %v620
    %v687 = vunpack.c.h.b16 %v620
    %v688 = vunpack.c.l.b16 %v621
    %v689 = vunpack.c.h.b16 %v621
    %v690 = vunpack.c.l.b16 %v622
    %v691 = vunpack.c.h.b16 %v622
    %v692 = vunpack.c.l.b16 %v623
    %v693 = vunpack.c.h.b16 %v623
    %v694 = vunpack.c.l.b16 %v624
    %v695 = vunpack.c.h.b16 %v624
    %v696 = vunpack.c.l.b16 %v625
    %v697 = vunpack.c.h.b16 %v625
    %v698 = vunpack.c.l.b16 %v626
    %v699 = vunpack.c.h.b16 %v626
    %v700 = vunpack.c.l.b16 %v627
    %v701 = vunpack.c.h.b16 %v627
    %v702 = vunpack.c.l.b16 %v628
    %v703 = vunpack.c.h.b16 %v628
    %v704 = vunpack.c.l.b16 %v629
    %v705 = vunpack.c.h.b16 %v629
    %v706 = vunpack.c.l.b16 %v630
    %v707 = vunpack.c.h.b16 %v630
    %v708 = vunpack.c.l.b16 %v631
    %v709 = vunpack.c.h.b16 %v631
    %v710 = vunpack.c.l.b16 %v632
    %v711 = vunpack.c.h.b16 %v632
    %v712 = vunpack.c.l.b16 %v633
    %v713 = vunpack.c.h.b16 %v633
    %v714 = vunpack.c.l.b16 %v634
    %v715 = vunpack.c.h.b16 %v634
    %v716 = vunpack.c.l.b16 %v635
    %v717 = vunpack.c.h.b16 %v635
    %v718 = vunpack.c.l.b16 %v636
    %v719 = vunpack.c.h.b16 %v636
    %v720 = vunpack.c.l.b16 %v637
    %v721 = vunpack.c.h.b16 %v637
    %v722 = vunpack.c.l.b16 %v638
    %v723 = vunpack.c.h.b16 %v638
    %v724 = vunpack.c.l.b16 %v639
    %v725 = vunpack.c.h.b16 %v639
    %v726 = vunpack.c.l.b16 %v640
    %v727 = vunpack.c.h.b16 %v640
    %v728 = vunpack.c.l.b16 %v641
    %v729 = vunpack.c.h.b16 %v641
    %v730 = vunpack.c.l.b16 %v642
    %v731 = vunpack.c.h.b16 %v642
    %v732 = vunpack.c.l.b16 %v643
    %v733 = vunpack.c.h.b16 %v643
    %v734 = vunpack.c.l.b16 %v644
    %v735 = vunpack.c.h.b16 %v644
    %v736 = vunpack.c.l.b16 %v645
    %v737 = vunpack.c.h.b16 %v645
    %v738 = vunpack.c.l.b16 %v646
    %v739 = vunpack.c.h.b16 %v646
    %v740 = vunpack.c.l.b16 %v647
    %v741 = vunpack.c.h.b16 %v647
    %v742 = vunpack.c.l.b16 %v648
    %v743 = vunpack.c.h.b16 %v648
    %v744 = vunpack.c.l.b16 %v649
    %v745 = vunpack.c.h.b16 %v649
    %v746 = vpack.c.b16 %v684, %v682
    %v747 = vpack.c.b16 %v685, %v683
    %v748 = vpack.c.b16 %v688, %v686
    %v749 = vpack.c.b16 %v689, %v687
    %v750 = vpack.c.b16 %v692, %v690
    %v751 = vpack.c.b16 %v693, %v691
    %v752 = vpack.c.b16 %v696, %v694
    %v753 = vpack.c.b16 %v697, %v695
    %v754 = vpack.c.b16 %v700, %v698
    %v755 = vpack.c.b16 %v701, %v699
    %v756 = vpack.c.b16 %v704, %v702
    %v757 = vpack.c.b16 %v705, %v703
    %v758 = vpack.c.b16 %v708, %v706
    %v759 = vpack.c.b16 %v709, %v707
    %v760 = vpack.c.b16 %v712, %v710
    %v761 = vpack.c.b16 %v713, %v711
    %v762 = vpack.c.b16 %v716, %v714
    %v763 = vpack.c.b16 %v717, %v715
    %v764 = vpack.c.b16 %v720, %v718
    %v765 = vpack.c.b16 %v721, %v719
    %v766 = vpack.c.b16 %v724, %v722
    %v767 = vpack.c.b16 %v725, %v723
    %v768 = vpack.c.b16 %v728, %v726
    %v769 = vpack.c.b16 %v729, %v727
    %v770 = vpack.c.b16 %v732, %v730
    %v771 = vpack.c.b16 %v733, %v731
    %v772 = vpack.c.b16 %v736, %v734
    %v773 = vpack.c.b16 %v737, %v735
    %v774 = vpack.c.b16 %v740, %v738
    %v775 = vpack.c.b16 %v741, %v739
    %v776 = vpack.c.b16 %v744, %v742
    %v777 = vpack.c.b16 %v745, %v743
    %810 = vmatprep.subr.bf16.mxu0 %v747
    %811 = vmatpush1.bf16.msra.mxu0 %v746
    %812 = vmatprep.subr.bf16.mxu0 %v749
    %813 = vmatpush1.bf16.msra.mxu0 %v748
    %814 = vmatprep.subr.bf16.mxu0 %v751
    %815 = vmatpush1.bf16.msra.mxu0 %v750
    %816 = vmatprep.subr.bf16.mxu0 %v753
    %817 = vmatpush1.bf16.msra.mxu0 %v752
    %818 = vmatprep.subr.bf16.mxu0 %v755
    %819 = vmatpush1.bf16.msra.mxu0 %v754
    %820 = vmatprep.subr.bf16.mxu0 %v757
    %821 = vmatpush1.bf16.msra.mxu0 %v756
    %822 = vmatprep.subr.bf16.mxu0 %v759
    %823 = vmatpush1.bf16.msra.mxu0 %v758
    %824 = vmatprep.subr.bf16.mxu0 %v761
    %825 = vmatpush1.bf16.msra.mxu0 %v760
    %826 = vmatprep.subr.bf16.mxu0 %v763
    %827 = vmatpush1.bf16.msra.mxu0 %v762
    %828 = vmatprep.subr.bf16.mxu0 %v765
    %829 = vmatpush1.bf16.msra.mxu0 %v764
    %830 = vmatprep.subr.bf16.mxu0 %v767
    %831 = vmatpush1.bf16.msra.mxu0 %v766
    %832 = vmatprep.subr.bf16.mxu0 %v769
    %833 = vmatpush1.bf16.msra.mxu0 %v768
    %834 = vmatprep.subr.bf16.mxu0 %v771
    %835 = vmatpush1.bf16.msra.mxu0 %v770
    %836 = vmatprep.subr.bf16.mxu0 %v773
    %837 = vmatpush1.bf16.msra.mxu0 %v772
    %838 = vmatprep.subr.bf16.mxu0 %v775
    %839 = vmatpush1.bf16.msra.mxu0 %v774
    %840 = vmatprep.subr.bf16.mxu0 %v777
    %841 = vmatpush1.bf16.msra.mxu0 %v776
    %842 = vmatprep.mubr.bf16.mxu0 %v617
    %843 = vmatmul.mubr.bf16.gmra.mrb[0].mxu0 %v616
    %v844 = vpop.f32.mrb[0].mxu0
    %v845 = vadd.f32 0.0, %v844
    %v846 = vpop.f32.mrb[0].mxu0
    %v847 = vadd.f32 0.0, %v846
    %v848 = vpop.f32.mrb[0].mxu0
    %v849 = vadd.f32 0.0, %v848
    %v850 = vpop.f32.mrb[0].mxu0
    %v851 = vadd.f32 0.0, %v850
    %852 = vdwg.mxu0
    %v885 = vunpack.c.l.b16 %v333
    %v886 = vunpack.c.h.b16 %v333
    %v887 = vunpack.c.l.b16 %v334
    %v888 = vunpack.c.h.b16 %v334
    %v889 = vunpack.c.l.b16 %v335
    %v890 = vunpack.c.h.b16 %v335
    %v891 = vunpack.c.l.b16 %v336
    %v892 = vunpack.c.h.b16 %v336
    %v893 = vunpack.c.l.b16 %v337
    %v894 = vunpack.c.h.b16 %v337
    %v895 = vunpack.c.l.b16 %v338
    %v896 = vunpack.c.h.b16 %v338
    %v897 = vunpack.c.l.b16 %v339
    %v898 = vunpack.c.h.b16 %v339
    %v899 = vunpack.c.l.b16 %v340
    %v900 = vunpack.c.h.b16 %v340
    %v901 = vunpack.c.l.b16 %v341
    %v902 = vunpack.c.h.b16 %v341
    %v903 = vunpack.c.l.b16 %v342
    %v904 = vunpack.c.h.b16 %v342
    %v905 = vunpack.c.l.b16 %v343
    %v906 = vunpack.c.h.b16 %v343
    %v907 = vunpack.c.l.b16 %v344
    %v908 = vunpack.c.h.b16 %v344
    %v909 = vunpack.c.l.b16 %v345
    %v910 = vunpack.c.h.b16 %v345
    %v911 = vunpack.c.l.b16 %v346
    %v912 = vunpack.c.h.b16 %v346
    %v913 = vunpack.c.l.b16 %v347
    %v914 = vunpack.c.h.b16 %v347
    %v915 = vunpack.c.l.b16 %v348
    %v916 = vunpack.c.h.b16 %v348
    %v917 = vunpack.c.l.b16 %v349
    %v918 = vunpack.c.h.b16 %v349
    %v919 = vunpack.c.l.b16 %v350
    %v920 = vunpack.c.h.b16 %v350
    %v921 = vunpack.c.l.b16 %v351
    %v922 = vunpack.c.h.b16 %v351
    %v923 = vunpack.c.l.b16 %v352
    %v924 = vunpack.c.h.b16 %v352
    %v925 = vunpack.c.l.b16 %v353
    %v926 = vunpack.c.h.b16 %v353
    %v927 = vunpack.c.l.b16 %v354
    %v928 = vunpack.c.h.b16 %v354
    %v929 = vunpack.c.l.b16 %v355
    %v930 = vunpack.c.h.b16 %v355
    %v931 = vunpack.c.l.b16 %v356
    %v932 = vunpack.c.h.b16 %v356
    %v933 = vunpack.c.l.b16 %v357
    %v934 = vunpack.c.h.b16 %v357
    %v935 = vunpack.c.l.b16 %v358
    %v936 = vunpack.c.h.b16 %v358
    %v937 = vunpack.c.l.b16 %v359
    %v938 = vunpack.c.h.b16 %v359
    %v939 = vunpack.c.l.b16 %v360
    %v940 = vunpack.c.h.b16 %v360
    %v941 = vunpack.c.l.b16 %v361
    %v942 = vunpack.c.h.b16 %v361
    %v943 = vunpack.c.l.b16 %v362
    %v944 = vunpack.c.h.b16 %v362
    %v945 = vunpack.c.l.b16 %v363
    %v946 = vunpack.c.h.b16 %v363
    %v947 = vunpack.c.l.b16 %v364
    %v948 = vunpack.c.h.b16 %v364
    %v949 = vpack.c.b16 %v887, %v885
    %v950 = vpack.c.b16 %v888, %v886
    %v951 = vpack.c.b16 %v891, %v889
    %v952 = vpack.c.b16 %v892, %v890
    %v953 = vpack.c.b16 %v895, %v893
    %v954 = vpack.c.b16 %v896, %v894
    %v955 = vpack.c.b16 %v899, %v897
    %v956 = vpack.c.b16 %v900, %v898
    %v957 = vpack.c.b16 %v903, %v901
    %v958 = vpack.c.b16 %v904, %v902
    %v959 = vpack.c.b16 %v907, %v905
    %v960 = vpack.c.b16 %v908, %v906
    %v961 = vpack.c.b16 %v911, %v909
    %v962 = vpack.c.b16 %v912, %v910
    %v963 = vpack.c.b16 %v915, %v913
    %v964 = vpack.c.b16 %v916, %v914
    %v965 = vpack.c.b16 %v919, %v917
    %v966 = vpack.c.b16 %v920, %v918
    %v967 = vpack.c.b16 %v923, %v921
    %v968 = vpack.c.b16 %v924, %v922
    %v969 = vpack.c.b16 %v927, %v925
    %v970 = vpack.c.b16 %v928, %v926
    %v971 = vpack.c.b16 %v931, %v929
    %v972 = vpack.c.b16 %v932, %v930
    %v973 = vpack.c.b16 %v935, %v933
    %v974 = vpack.c.b16 %v936, %v934
    %v975 = vpack.c.b16 %v939, %v937
    %v976 = vpack.c.b16 %v940, %v938
    %v977 = vpack.c.b16 %v943, %v941
    %v978 = vpack.c.b16 %v944, %v942
    %v979 = vpack.c.b16 %v947, %v945
    %v980 = vpack.c.b16 %v948, %v946
    %1013 = vmatprep.subr.bf16.mxu0 %v950
    %1014 = vmatpush1.bf16.msra.mxu0 %v949
    %1015 = vmatprep.subr.bf16.mxu0 %v952
    %1016 = vmatpush1.bf16.msra.mxu0 %v951
    %1017 = vmatprep.subr.bf16.mxu0 %v954
    %1018 = vmatpush1.bf16.msra.mxu0 %v953
    %1019 = vmatprep.subr.bf16.mxu0 %v956
    %1020 = vmatpush1.bf16.msra.mxu0 %v955
    %1021 = vmatprep.subr.bf16.mxu0 %v958
    %1022 = vmatpush1.bf16.msra.mxu0 %v957
    %1023 = vmatprep.subr.bf16.mxu0 %v960
    %1024 = vmatpush1.bf16.msra.mxu0 %v959
    %1025 = vmatprep.subr.bf16.mxu0 %v962
    %1026 = vmatpush1.bf16.msra.mxu0 %v961
    %1027 = vmatprep.subr.bf16.mxu0 %v964
    %1028 = vmatpush1.bf16.msra.mxu0 %v963
    %1029 = vmatprep.subr.bf16.mxu0 %v966
    %1030 = vmatpush1.bf16.msra.mxu0 %v965
    %1031 = vmatprep.subr.bf16.mxu0 %v968
    %1032 = vmatpush1.bf16.msra.mxu0 %v967
    %1033 = vmatprep.subr.bf16.mxu0 %v970
    %1034 = vmatpush1.bf16.msra.mxu0 %v969
    %1035 = vmatprep.subr.bf16.mxu0 %v972
    %1036 = vmatpush1.bf16.msra.mxu0 %v971
    %1037 = vmatprep.subr.bf16.mxu0 %v974
    %1038 = vmatpush1.bf16.msra.mxu0 %v973
    %1039 = vmatprep.subr.bf16.mxu0 %v976
    %1040 = vmatpush1.bf16.msra.mxu0 %v975
    %1041 = vmatprep.subr.bf16.mxu0 %v978
    %1042 = vmatpush1.bf16.msra.mxu0 %v977
    %1043 = vmatprep.subr.bf16.mxu0 %v980
    %1044 = vmatpush1.bf16.msra.mxu0 %v979
    %1045 = vmatprep.mubr.bf16.mxu0 %v332
    %1046 = vmatmul.mubr.bf16.gmra.mrb[0].mxu0 %v331
    %v1047 = vpop.f32.mrb[0].mxu0
    %v1048 = vadd.f32 %v845, %v1047
    %v1049 = vpop.f32.mrb[0].mxu0
    %v1050 = vadd.f32 %v847, %v1049
    %v1051 = vpop.f32.mrb[0].mxu0
    %v1052 = vadd.f32 %v849, %v1051
    %v1053 = vpop.f32.mrb[0].mxu0
    %v1054 = vadd.f32 %v851, %v1053
    %1055 = vdwg.mxu0
    %v1056 = vld [vmem:[#allocation5 + $0x10] sm:$0xff]
    %v1057 = vld [vmem:[#allocation5 + $0x30] sm:$0xff]
    %v1058 = vld [vmem:[#allocation5 + $0x50] sm:$0xff]
    %v1059 = vld [vmem:[#allocation5 + $0x70] sm:$0xff]
    %v1060 = vld [vmem:[#allocation5 + $0x90] sm:$0xff]
    %v1061 = vld [vmem:[#allocation5 + $0xb0] sm:$0xff]
    %v1062 = vld [vmem:[#allocation5 + $0xd0] sm:$0xff]
    %v1063 = vld [vmem:[#allocation5 + $0xf0] sm:$0xff]
    %v1064 = vld [vmem:[#allocation5 + $0x110] sm:$0xff]
    %v1065 = vld [vmem:[#allocation5 + $0x130] sm:$0xff]
    %v1066 = vld [vmem:[#allocation5 + $0x150] sm:$0xff]
    %v1067 = vld [vmem:[#allocation5 + $0x170] sm:$0xff]
    %v1068 = vld [vmem:[#allocation5 + $0x190] sm:$0xff]
    %v1069 = vld [vmem:[#allocation5 + $0x1b0] sm:$0xff]
    %v1070 = vld [vmem:[#allocation5 + $0x1d0] sm:$0xff]
    %v1071 = vld [vmem:[#allocation5 + $0x1f0] sm:$0xff]
    %v1072 = vld [vmem:[#allocation5 + $0x210] sm:$0xff]
    %v1073 = vld [vmem:[#allocation5 + $0x230] sm:$0xff]
    %v1074 = vld [vmem:[#allocation5 + $0x250] sm:$0xff]
    %v1075 = vld [vmem:[#allocation5 + $0x270] sm:$0xff]
    %v1076 = vld [vmem:[#allocation5 + $0x290] sm:$0xff]
    %v1077 = vld [vmem:[#allocation5 + $0x2b0] sm:$0xff]
    %v1078 = vld [vmem:[#allocation5 + $0x2d0] sm:$0xff]
    %v1079 = vld [vmem:[#allocation5 + $0x2f0] sm:$0xff]
    %v1080 = vld [vmem:[#allocation5 + $0x310] sm:$0xff]
    %v1081 = vld [vmem:[#allocation5 + $0x330] sm:$0xff]
    %v1082 = vld [vmem:[#allocation5 + $0x350] sm:$0xff]
    %v1083 = vld [vmem:[#allocation5 + $0x370] sm:$0xff]
    %v1084 = vld [vmem:[#allocation5 + $0x390] sm:$0xff]
    %v1085 = vld [vmem:[#allocation5 + $0x3b0] sm:$0xff]
    %v1086 = vld [vmem:[#allocation5 + $0x3d0] sm:$0xff]
    %v1087 = vld [vmem:[#allocation5 + $0x3f0] sm:$0xff]
    %v1088 = vld [vmem:[#allocation7 + $0x4] sm:$0x3]
    %v1090 = vlaneseq
    %v1091 = vshrl.u32 %v1090, 7
    %v1092 = vsub.s32 0, %v1091
    %v1093 = vrot.slane %v1088, %v1092
    %v1094 = vlaneseq
    %v1095 = vshrl.u32 %v1094, 7
    %v1096 = vsub.s32 1, %v1095
    %v1097 = vrot.slane %v1088, %v1096
    %v1132 = vunpack.c.l.b16 %v1056
    %v1133 = vunpack.c.h.b16 %v1056
    %v1134 = vunpack.c.l.b16 %v1057
    %v1135 = vunpack.c.h.b16 %v1057
    %v1136 = vunpack.c.l.b16 %v1058
    %v1137 = vunpack.c.h.b16 %v1058
    %v1138 = vunpack.c.l.b16 %v1059
    %v1139 = vunpack.c.h.b16 %v1059
    %v1140 = vunpack.c.l.b16 %v1060
    %v1141 = vunpack.c.h.b16 %v1060
    %v1142 = vunpack.c.l.b16 %v1061
    %v1143 = vunpack.c.h.b16 %v1061
    %v1144 = vunpack.c.l.b16 %v1062
    %v1145 = vunpack.c.h.b16 %v1062
    %v1146 = vunpack.c.l.b16 %v1063
    %v1147 = vunpack.c.h.b16 %v1063
    %v1148 = vunpack.c.l.b16 %v1064
    %v1149 = vunpack.c.h.b16 %v1064
    %v1150 = vunpack.c.l.b16 %v1065
    %v1151 = vunpack.c.h.b16 %v1065
    %v1152 = vunpack.c.l.b16 %v1066
    %v1153 = vunpack.c.h.b16 %v1066
    %v1154 = vunpack.c.l.b16 %v1067
    %v1155 = vunpack.c.h.b16 %v1067
    %v1156 = vunpack.c.l.b16 %v1068
    %v1157 = vunpack.c.h.b16 %v1068
    %v1158 = vunpack.c.l.b16 %v1069
    %v1159 = vunpack.c.h.b16 %v1069
    %v1160 = vunpack.c.l.b16 %v1070
    %v1161 = vunpack.c.h.b16 %v1070
    %v1162 = vunpack.c.l.b16 %v1071
    %v1163 = vunpack.c.h.b16 %v1071
    %v1164 = vunpack.c.l.b16 %v1072
    %v1165 = vunpack.c.h.b16 %v1072
    %v1166 = vunpack.c.l.b16 %v1073
    %v1167 = vunpack.c.h.b16 %v1073
    %v1168 = vunpack.c.l.b16 %v1074
    %v1169 = vunpack.c.h.b16 %v1074
    %v1170 = vunpack.c.l.b16 %v1075
    %v1171 = vunpack.c.h.b16 %v1075
    %v1172 = vunpack.c.l.b16 %v1076
    %v1173 = vunpack.c.h.b16 %v1076
    %v1174 = vunpack.c.l.b16 %v1077
    %v1175 = vunpack.c.h.b16 %v1077
    %v1176 = vunpack.c.l.b16 %v1078
    %v1177 = vunpack.c.h.b16 %v1078
    %v1178 = vunpack.c.l.b16 %v1079
    %v1179 = vunpack.c.h.b16 %v1079
    %v1180 = vunpack.c.l.b16 %v1080
    %v1181 = vunpack.c.h.b16 %v1080
    %v1182 = vunpack.c.l.b16 %v1081
    %v1183 = vunpack.c.h.b16 %v1081
    %v1184 = vunpack.c.l.b16 %v1082
    %v1185 = vunpack.c.h.b16 %v1082
    %v1186 = vunpack.c.l.b16 %v1083
    %v1187 = vunpack.c.h.b16 %v1083
    %v1188 = vunpack.c.l.b16 %v1084
    %v1189 = vunpack.c.h.b16 %v1084
    %v1190 = vunpack.c.l.b16 %v1085
    %v1191 = vunpack.c.h.b16 %v1085
    %v1192 = vunpack.c.l.b16 %v1086
    %v1193 = vunpack.c.h.b16 %v1086
    %v1194 = vunpack.c.l.b16 %v1087
    %v1195 = vunpack.c.h.b16 %v1087
    %v1196 = vpack.c.b16 %v1134, %v1132
    %v1197 = vpack.c.b16 %v1135, %v1133
    %v1198 = vpack.c.b16 %v1138, %v1136
    %v1199 = vpack.c.b16 %v1139, %v1137
    %v1200 = vpack.c.b16 %v1142, %v1140
    %v1201 = vpack.c.b16 %v1143, %v1141
    %v1202 = vpack.c.b16 %v1146, %v1144
    %v1203 = vpack.c.b16 %v1147, %v1145
    %v1204 = vpack.c.b16 %v1150, %v1148
    %v1205 = vpack.c.b16 %v1151, %v1149
    %v1206 = vpack.c.b16 %v1154, %v1152
    %v1207 = vpack.c.b16 %v1155, %v1153
    %v1208 = vpack.c.b16 %v1158, %v1156
    %v1209 = vpack.c.b16 %v1159, %v1157
    %v1210 = vpack.c.b16 %v1162, %v1160
    %v1211 = vpack.c.b16 %v1163, %v1161
    %v1212 = vpack.c.b16 %v1166, %v1164
    %v1213 = vpack.c.b16 %v1167, %v1165
    %v1214 = vpack.c.b16 %v1170, %v1168
    %v1215 = vpack.c.b16 %v1171, %v1169
    %v1216 = vpack.c.b16 %v1174, %v1172
    %v1217 = vpack.c.b16 %v1175, %v1173
    %v1218 = vpack.c.b16 %v1178, %v1176
    %v1219 = vpack.c.b16 %v1179, %v1177
    %v1220 = vpack.c.b16 %v1182, %v1180
    %v1221 = vpack.c.b16 %v1183, %v1181
    %v1222 = vpack.c.b16 %v1186, %v1184
    %v1223 = vpack.c.b16 %v1187, %v1185
    %v1224 = vpack.c.b16 %v1190, %v1188
    %v1225 = vpack.c.b16 %v1191, %v1189
    %v1226 = vpack.c.b16 %v1194, %v1192
    %v1227 = vpack.c.b16 %v1195, %v1193
    %1260 = vmatprep.subr.bf16.mxu0 %v1197
    %1261 = vmatpush1.bf16.msra.mxu0 %v1196
    %1262 = vmatprep.subr.bf16.mxu0 %v1199
    %1263 = vmatpush1.bf16.msra.mxu0 %v1198
    %1264 = vmatprep.subr.bf16.mxu0 %v1201
    %1265 = vmatpush1.bf16.msra.mxu0 %v1200
    %1266 = vmatprep.subr.bf16.mxu0 %v1203
    %1267 = vmatpush1.bf16.msra.mxu0 %v1202
    %1268 = vmatprep.subr.bf16.mxu0 %v1205
    %1269 = vmatpush1.bf16.msra.mxu0 %v1204
    %1270 = vmatprep.subr.bf16.mxu0 %v1207
    %1271 = vmatpush1.bf16.msra.mxu0 %v1206
    %1272 = vmatprep.subr.bf16.mxu0 %v1209
    %1273 = vmatpush1.bf16.msra.mxu0 %v1208
    %1274 = vmatprep.subr.bf16.mxu0 %v1211
    %1275 = vmatpush1.bf16.msra.mxu0 %v1210
    %1276 = vmatprep.subr.bf16.mxu0 %v1213
    %1277 = vmatpush1.bf16.msra.mxu0 %v1212
    %1278 = vmatprep.subr.bf16.mxu0 %v1215
    %1279 = vmatpush1.bf16.msra.mxu0 %v1214
    %1280 = vmatprep.subr.bf16.mxu0 %v1217
    %1281 = vmatpush1.bf16.msra.mxu0 %v1216
    %1282 = vmatprep.subr.bf16.mxu0 %v1219
    %1283 = vmatpush1.bf16.msra.mxu0 %v1218
    %1284 = vmatprep.subr.bf16.mxu0 %v1221
    %1285 = vmatpush1.bf16.msra.mxu0 %v1220
    %1286 = vmatprep.subr.bf16.mxu0 %v1223
    %1287 = vmatpush1.bf16.msra.mxu0 %v1222
    %1288 = vmatprep.subr.bf16.mxu0 %v1225
    %1289 = vmatpush1.bf16.msra.mxu0 %v1224
    %1290 = vmatprep.subr.bf16.mxu0 %v1227
    %1291 = vmatpush1.bf16.msra.mxu0 %v1226
    %1292 = vmatprep.mubr.bf16.mxu0 %v79
    %1293 = vmatmul.mubr.bf16.gmra.mrb[0].mxu0 %v78
    %v1294 = vpop.f32.mrb[0].mxu0
    %v1295 = vadd.f32 %v1093, %v1294
    %v1296 = vpop.f32.mrb[0].mxu0
    %v1297 = vadd.f32 %v1097, %v1296
    %v1298 = vpop.f32.mrb[0].mxu0
    %v1299 = vadd.f32 %v1093, %v1298
    %v1300 = vpop.f32.mrb[0].mxu0
    %v1301 = vadd.f32 %v1097, %v1300
    %1302 = vdwg.mxu0
    %v1303 = vmax.f32 %v1295, 0.0
    %v1304 = vmax.f32 %v1297, 0.0
    %v1305 = vmax.f32 %v1299, 0.0
    %v1306 = vmax.f32 %v1301, 0.0
    %v1307 = vpack.c.bf16 %v1305, %v1303
    %v1308 = vpack.c.bf16 %v1306, %v1304
    %v1309 = vld [vmem:[#allocation8 + $0x200] sm:$0xff]
    %v1310 = vld [vmem:[#allocation8 + $0x208] sm:$0xff]
    %v1311 = vld [vmem:[#allocation8 + $0x210] sm:$0xff]
    %v1312 = vld [vmem:[#allocation8 + $0x218] sm:$0xff]
    %v1313 = vld [vmem:[#allocation8 + $0x220] sm:$0xff]
    %v1314 = vld [vmem:[#allocation8 + $0x228] sm:$0xff]
    %v1315 = vld [vmem:[#allocation8 + $0x230] sm:$0xff]
    %v1316 = vld [vmem:[#allocation8 + $0x238] sm:$0xff]
    %v1317 = vld [vmem:[#allocation8 + $0x240] sm:$0xff]
    %v1318 = vld [vmem:[#allocation8 + $0x248] sm:$0xff]
    %v1319 = vld [vmem:[#allocation8 + $0x250] sm:$0xff]
    %v1320 = vld [vmem:[#allocation8 + $0x258] sm:$0xff]
    %v1321 = vld [vmem:[#allocation8 + $0x260] sm:$0xff]
    %v1322 = vld [vmem:[#allocation8 + $0x268] sm:$0xff]
    %v1323 = vld [vmem:[#allocation8 + $0x270] sm:$0xff]
    %v1324 = vld [vmem:[#allocation8 + $0x278] sm:$0xff]
    %v1325 = vld [vmem:[#allocation8 + $0x280] sm:$0xff]
    %v1326 = vld [vmem:[#allocation8 + $0x288] sm:$0xff]
    %v1327 = vld [vmem:[#allocation8 + $0x290] sm:$0xff]
    %v1328 = vld [vmem:[#allocation8 + $0x298] sm:$0xff]
    %v1329 = vld [vmem:[#allocation8 + $0x2a0] sm:$0xff]
    %v1330 = vld [vmem:[#allocation8 + $0x2a8] sm:$0xff]
    %v1331 = vld [vmem:[#allocation8 + $0x2b0] sm:$0xff]
    %v1332 = vld [vmem:[#allocation8 + $0x2b8] sm:$0xff]
    %v1333 = vld [vmem:[#allocation8 + $0x2c0] sm:$0xff]
    %v1334 = vld [vmem:[#allocation8 + $0x2c8] sm:$0xff]
    %v1335 = vld [vmem:[#allocation8 + $0x2d0] sm:$0xff]
    %v1336 = vld [vmem:[#allocation8 + $0x2d8] sm:$0xff]
    %v1337 = vld [vmem:[#allocation8 + $0x2e0] sm:$0xff]
    %v1338 = vld [vmem:[#allocation8 + $0x2e8] sm:$0xff]
    %v1339 = vld [vmem:[#allocation8 + $0x2f0] sm:$0xff]
    %v1340 = vld [vmem:[#allocation8 + $0x2f8] sm:$0xff]
    %v1373 = vunpack.c.l.b16 %v1309
    %v1374 = vunpack.c.h.b16 %v1309
    %v1375 = vunpack.c.l.b16 %v1310
    %v1376 = vunpack.c.h.b16 %v1310
    %v1377 = vunpack.c.l.b16 %v1311
    %v1378 = vunpack.c.h.b16 %v1311
    %v1379 = vunpack.c.l.b16 %v1312
    %v1380 = vunpack.c.h.b16 %v1312
    %v1381 = vunpack.c.l.b16 %v1313
    %v1382 = vunpack.c.h.b16 %v1313
    %v1383 = vunpack.c.l.b16 %v1314
    %v1384 = vunpack.c.h.b16 %v1314
    %v1385 = vunpack.c.l.b16 %v1315
    %v1386 = vunpack.c.h.b16 %v1315
    %v1387 = vunpack.c.l.b16 %v1316
    %v1388 = vunpack.c.h.b16 %v1316
    %v1389 = vunpack.c.l.b16 %v1317
    %v1390 = vunpack.c.h.b16 %v1317
    %v1391 = vunpack.c.l.b16 %v1318
    %v1392 = vunpack.c.h.b16 %v1318
    %v1393 = vunpack.c.l.b16 %v1319
    %v1394 = vunpack.c.h.b16 %v1319
    %v1395 = vunpack.c.l.b16 %v1320
    %v1396 = vunpack.c.h.b16 %v1320
    %v1397 = vunpack.c.l.b16 %v1321
    %v1398 = vunpack.c.h.b16 %v1321
    %v1399 = vunpack.c.l.b16 %v1322
    %v1400 = vunpack.c.h.b16 %v1322
    %v1401 = vunpack.c.l.b16 %v1323
    %v1402 = vunpack.c.h.b16 %v1323
    %v1403 = vunpack.c.l.b16 %v1324
    %v1404 = vunpack.c.h.b16 %v1324
    %v1405 = vunpack.c.l.b16 %v1325
    %v1406 = vunpack.c.h.b16 %v1325
    %v1407 = vunpack.c.l.b16 %v1326
    %v1408 = vunpack.c.h.b16 %v1326
    %v1409 = vunpack.c.l.b16 %v1327
    %v1410 = vunpack.c.h.b16 %v1327
    %v1411 = vunpack.c.l.b16 %v1328
    %v1412 = vunpack.c.h.b16 %v1328
    %v1413 = vunpack.c.l.b16 %v1329
    %v1414 = vunpack.c.h.b16 %v1329
    %v1415 = vunpack.c.l.b16 %v1330
    %v1416 = vunpack.c.h.b16 %v1330
    %v1417 = vunpack.c.l.b16 %v1331
    %v1418 = vunpack.c.h.b16 %v1331
    %v1419 = vunpack.c.l.b16 %v1332
    %v1420 = vunpack.c.h.b16 %v1332
    %v1421 = vunpack.c.l.b16 %v1333
    %v1422 = vunpack.c.h.b16 %v1333
    %v1423 = vunpack.c.l.b16 %v1334
    %v1424 = vunpack.c.h.b16 %v1334
    %v1425 = vunpack.c.l.b16 %v1335
    %v1426 = vunpack.c.h.b16 %v1335
    %v1427 = vunpack.c.l.b16 %v1336
    %v1428 = vunpack.c.h.b16 %v1336
    %v1429 = vunpack.c.l.b16 %v1337
    %v1430 = vunpack.c.h.b16 %v1337
    %v1431 = vunpack.c.l.b16 %v1338
    %v1432 = vunpack.c.h.b16 %v1338
    %v1433 = vunpack.c.l.b16 %v1339
    %v1434 = vunpack.c.h.b16 %v1339
    %v1435 = vunpack.c.l.b16 %v1340
    %v1436 = vunpack.c.h.b16 %v1340
    %v1437 = vpack.c.b16 %v1375, %v1373
    %v1438 = vpack.c.b16 %v1376, %v1374
    %v1439 = vpack.c.b16 %v1379, %v1377
    %v1440 = vpack.c.b16 %v1380, %v1378
    %v1441 = vpack.c.b16 %v1383, %v1381
    %v1442 = vpack.c.b16 %v1384, %v1382
    %v1443 = vpack.c.b16 %v1387, %v1385
    %v1444 = vpack.c.b16 %v1388, %v1386
    %v1445 = vpack.c.b16 %v1391, %v1389
    %v1446 = vpack.c.b16 %v1392, %v1390
    %v1447 = vpack.c.b16 %v1395, %v1393
    %v1448 = vpack.c.b16 %v1396, %v1394
    %v1449 = vpack.c.b16 %v1399, %v1397
    %v1450 = vpack.c.b16 %v1400, %v1398
    %v1451 = vpack.c.b16 %v1403, %v1401
    %v1452 = vpack.c.b16 %v1404, %v1402
    %v1453 = vpack.c.b16 %v1407, %v1405
    %v1454 = vpack.c.b16 %v1408, %v1406
    %v1455 = vpack.c.b16 %v1411, %v1409
    %v1456 = vpack.c.b16 %v1412, %v1410
    %v1457 = vpack.c.b16 %v1415, %v1413
    %v1458 = vpack.c.b16 %v1416, %v1414
    %v1459 = vpack.c.b16 %v1419, %v1417
    %v1460 = vpack.c.b16 %v1420, %v1418
    %v1461 = vpack.c.b16 %v1423, %v1421
    %v1462 = vpack.c.b16 %v1424, %v1422
    %v1463 = vpack.c.b16 %v1427, %v1425
    %v1464 = vpack.c.b16 %v1428, %v1426
    %v1465 = vpack.c.b16 %v1431, %v1429
    %v1466 = vpack.c.b16 %v1432, %v1430
    %v1467 = vpack.c.b16 %v1435, %v1433
    %v1468 = vpack.c.b16 %v1436, %v1434
    %1501 = vmatprep.subr.bf16.mxu0 %v1438
    %1502 = vmatpush1.bf16.msra.mxu0 %v1437
    %1503 = vmatprep.subr.bf16.mxu0 %v1440
    %1504 = vmatpush1.bf16.msra.mxu0 %v1439
    %1505 = vmatprep.subr.bf16.mxu0 %v1442
    %1506 = vmatpush1.bf16.msra.mxu0 %v1441
    %1507 = vmatprep.subr.bf16.mxu0 %v1444
    %1508 = vmatpush1.bf16.msra.mxu0 %v1443
    %1509 = vmatprep.subr.bf16.mxu0 %v1446
    %1510 = vmatpush1.bf16.msra.mxu0 %v1445
    %1511 = vmatprep.subr.bf16.mxu0 %v1448
    %1512 = vmatpush1.bf16.msra.mxu0 %v1447
    %1513 = vmatprep.subr.bf16.mxu0 %v1450
    %1514 = vmatpush1.bf16.msra.mxu0 %v1449
    %1515 = vmatprep.subr.bf16.mxu0 %v1452
    %1516 = vmatpush1.bf16.msra.mxu0 %v1451
    %1517 = vmatprep.subr.bf16.mxu0 %v1454
    %1518 = vmatpush1.bf16.msra.mxu0 %v1453
    %1519 = vmatprep.subr.bf16.mxu0 %v1456
    %1520 = vmatpush1.bf16.msra.mxu0 %v1455
    %1521 = vmatprep.subr.bf16.mxu0 %v1458
    %1522 = vmatpush1.bf16.msra.mxu0 %v1457
    %1523 = vmatprep.subr.bf16.mxu0 %v1460
    %1524 = vmatpush1.bf16.msra.mxu0 %v1459
    %1525 = vmatprep.subr.bf16.mxu0 %v1462
    %1526 = vmatpush1.bf16.msra.mxu0 %v1461
    %1527 = vmatprep.subr.bf16.mxu0 %v1464
    %1528 = vmatpush1.bf16.msra.mxu0 %v1463
    %1529 = vmatprep.subr.bf16.mxu0 %v1466
    %1530 = vmatpush1.bf16.msra.mxu0 %v1465
    %1531 = vmatprep.subr.bf16.mxu0 %v1468
    %1532 = vmatpush1.bf16.msra.mxu0 %v1467
    %1533 = vmatprep.mubr.bf16.mxu0 %v1308
    %1534 = vmatmul.mubr.bf16.gmra.mrb[0].mxu0 %v1307
    %v1535 = vpop.f32.mrb[0].mxu0
    %v1536 = vadd.f32 0.0, %v1535
    %v1537 = vpop.f32.mrb[0].mxu0
    %v1538 = vadd.f32 0.0, %v1537
    %v1539 = vpop.f32.mrb[0].mxu0
    %v1540 = vadd.f32 0.0, %v1539
    %v1541 = vpop.f32.mrb[0].mxu0
    %v1542 = vadd.f32 0.0, %v1541
    %1543 = vdwg.mxu0
    %v1544 = vadd.f32 %v1048, %v1536
    %v1545 = vadd.f32 %v1050, %v1538
    %v1546 = vadd.f32 %v1052, %v1540
    %v1547 = vadd.f32 %v1054, %v1542
    %v1548 = vld [vmem:[#allocation5 + $0x18] sm:$0xff]
    %v1549 = vld [vmem:[#allocation5 + $0x38] sm:$0xff]
    %v1550 = vld [vmem:[#allocation5 + $0x58] sm:$0xff]
    %v1551 = vld [vmem:[#allocation5 + $0x78] sm:$0xff]
    %v1552 = vld [vmem:[#allocation5 + $0x98] sm:$0xff]
    %v1553 = vld [vmem:[#allocation5 + $0xb8] sm:$0xff]
    %v1554 = vld [vmem:[#allocation5 + $0xd8] sm:$0xff]
    %v1555 = vld [vmem:[#allocation5 + $0xf8] sm:$0xff]
    %v1556 = vld [vmem:[#allocation5 + $0x118] sm:$0xff]
    %v1557 = vld [vmem:[#allocation5 + $0x138] sm:$0xff]
    %v1558 = vld [vmem:[#allocation5 + $0x158] sm:$0xff]
    %v1559 = vld [vmem:[#allocation5 + $0x178] sm:$0xff]
    %v1560 = vld [vmem:[#allocation5 + $0x198] sm:$0xff]
    %v1561 = vld [vmem:[#allocation5 + $0x1b8] sm:$0xff]
    %v1562 = vld [vmem:[#allocation5 + $0x1d8] sm:$0xff]
    %v1563 = vld [vmem:[#allocation5 + $0x1f8] sm:$0xff]
    %v1564 = vld [vmem:[#allocation5 + $0x218] sm:$0xff]
    %v1565 = vld [vmem:[#allocation5 + $0x238] sm:$0xff]
    %v1566 = vld [vmem:[#allocation5 + $0x258] sm:$0xff]
    %v1567 = vld [vmem:[#allocation5 + $0x278] sm:$0xff]
    %v1568 = vld [vmem:[#allocation5 + $0x298] sm:$0xff]
    %v1569 = vld [vmem:[#allocation5 + $0x2b8] sm:$0xff]
    %v1570 = vld [vmem:[#allocation5 + $0x2d8] sm:$0xff]
    %v1571 = vld [vmem:[#allocation5 + $0x2f8] sm:$0xff]
    %v1572 = vld [vmem:[#allocation5 + $0x318] sm:$0xff]
    %v1573 = vld [vmem:[#allocation5 + $0x338] sm:$0xff]
    %v1574 = vld [vmem:[#allocation5 + $0x358] sm:$0xff]
    %v1575 = vld [vmem:[#allocation5 + $0x378] sm:$0xff]
    %v1576 = vld [vmem:[#allocation5 + $0x398] sm:$0xff]
    %v1577 = vld [vmem:[#allocation5 + $0x3b8] sm:$0xff]
    %v1578 = vld [vmem:[#allocation5 + $0x3d8] sm:$0xff]
    %v1579 = vld [vmem:[#allocation5 + $0x3f8] sm:$0xff]
    %v1580 = vld [vmem:[#allocation7 + $0x6] sm:$0x3]
    %v1582 = vlaneseq
    %v1583 = vshrl.u32 %v1582, 7
    %v1584 = vsub.s32 0, %v1583
    %v1585 = vrot.slane %v1580, %v1584
    %v1586 = vlaneseq
    %v1587 = vshrl.u32 %v1586, 7
    %v1588 = vsub.s32 1, %v1587
    %v1589 = vrot.slane %v1580, %v1588
    %v1624 = vunpack.c.l.b16 %v1548
    %v1625 = vunpack.c.h.b16 %v1548
    %v1626 = vunpack.c.l.b16 %v1549
    %v1627 = vunpack.c.h.b16 %v1549
    %v1628 = vunpack.c.l.b16 %v1550
    %v1629 = vunpack.c.h.b16 %v1550
    %v1630 = vunpack.c.l.b16 %v1551
    %v1631 = vunpack.c.h.b16 %v1551
    %v1632 = vunpack.c.l.b16 %v1552
    %v1633 = vunpack.c.h.b16 %v1552
    %v1634 = vunpack.c.l.b16 %v1553
    %v1635 = vunpack.c.h.b16 %v1553
    %v1636 = vunpack.c.l.b16 %v1554
    %v1637 = vunpack.c.h.b16 %v1554
    %v1638 = vunpack.c.l.b16 %v1555
    %v1639 = vunpack.c.h.b16 %v1555
    %v1640 = vunpack.c.l.b16 %v1556
    %v1641 = vunpack.c.h.b16 %v1556
    %v1642 = vunpack.c.l.b16 %v1557
    %v1643 = vunpack.c.h.b16 %v1557
    %v1644 = vunpack.c.l.b16 %v1558
    %v1645 = vunpack.c.h.b16 %v1558
    %v1646 = vunpack.c.l.b16 %v1559
    %v1647 = vunpack.c.h.b16 %v1559
    %v1648 = vunpack.c.l.b16 %v1560
    %v1649 = vunpack.c.h.b16 %v1560
    %v1650 = vunpack.c.l.b16 %v1561
    %v1651 = vunpack.c.h.b16 %v1561
    %v1652 = vunpack.c.l.b16 %v1562
    %v1653 = vunpack.c.h.b16 %v1562
    %v1654 = vunpack.c.l.b16 %v1563
    %v1655 = vunpack.c.h.b16 %v1563
    %v1656 = vunpack.c.l.b16 %v1564
    %v1657 = vunpack.c.h.b16 %v1564
    %v1658 = vunpack.c.l.b16 %v1565
    %v1659 = vunpack.c.h.b16 %v1565
    %v1660 = vunpack.c.l.b16 %v1566
    %v1661 = vunpack.c.h.b16 %v1566
    %v1662 = vunpack.c.l.b16 %v1567
    %v1663 = vunpack.c.h.b16 %v1567
    %v1664 = vunpack.c.l.b16 %v1568
    %v1665 = vunpack.c.h.b16 %v1568
    %v1666 = vunpack.c.l.b16 %v1569
    %v1667 = vunpack.c.h.b16 %v1569
    %v1668 = vunpack.c.l.b16 %v1570
    %v1669 = vunpack.c.h.b16 %v1570
    %v1670 = vunpack.c.l.b16 %v1571
    %v1671 = vunpack.c.h.b16 %v1571
    %v1672 = vunpack.c.l.b16 %v1572
    %v1673 = vunpack.c.h.b16 %v1572
    %v1674 = vunpack.c.l.b16 %v1573
    %v1675 = vunpack.c.h.b16 %v1573
    %v1676 = vunpack.c.l.b16 %v1574
    %v1677 = vunpack.c.h.b16 %v1574
    %v1678 = vunpack.c.l.b16 %v1575
    %v1679 = vunpack.c.h.b16 %v1575
    %v1680 = vunpack.c.l.b16 %v1576
    %v1681 = vunpack.c.h.b16 %v1576
    %v1682 = vunpack.c.l.b16 %v1577
    %v1683 = vunpack.c.h.b16 %v1577
    %v1684 = vunpack.c.l.b16 %v1578
    %v1685 = vunpack.c.h.b16 %v1578
    %v1686 = vunpack.c.l.b16 %v1579
    %v1687 = vunpack.c.h.b16 %v1579
    %v1688 = vpack.c.b16 %v1626, %v1624
    %v1689 = vpack.c.b16 %v1627, %v1625
    %v1690 = vpack.c.b16 %v1630, %v1628
    %v1691 = vpack.c.b16 %v1631, %v1629
    %v1692 = vpack.c.b16 %v1634, %v1632
    %v1693 = vpack.c.b16 %v1635, %v1633
    %v1694 = vpack.c.b16 %v1638, %v1636
    %v1695 = vpack.c.b16 %v1639, %v1637
    %v1696 = vpack.c.b16 %v1642, %v1640
    %v1697 = vpack.c.b16 %v1643, %v1641
    %v1698 = vpack.c.b16 %v1646, %v1644
    %v1699 = vpack.c.b16 %v1647, %v1645
    %v1700 = vpack.c.b16 %v1650, %v1648
    %v1701 = vpack.c.b16 %v1651, %v1649
    %v1702 = vpack.c.b16 %v1654, %v1652
    %v1703 = vpack.c.b16 %v1655, %v1653
    %v1704 = vpack.c.b16 %v1658, %v1656
    %v1705 = vpack.c.b16 %v1659, %v1657
    %v1706 = vpack.c.b16 %v1662, %v1660
    %v1707 = vpack.c.b16 %v1663, %v1661
    %v1708 = vpack.c.b16 %v1666, %v1664
    %v1709 = vpack.c.b16 %v1667, %v1665
    %v1710 = vpack.c.b16 %v1670, %v1668
    %v1711 = vpack.c.b16 %v1671, %v1669
    %v1712 = vpack.c.b16 %v1674, %v1672
    %v1713 = vpack.c.b16 %v1675, %v1673
    %v1714 = vpack.c.b16 %v1678, %v1676
    %v1715 = vpack.c.b16 %v1679, %v1677
    %v1716 = vpack.c.b16 %v1682, %v1680
    %v1717 = vpack.c.b16 %v1683, %v1681
    %v1718 = vpack.c.b16 %v1686, %v1684
    %v1719 = vpack.c.b16 %v1687, %v1685
    %1752 = vmatprep.subr.bf16.mxu0 %v1689
    %1753 = vmatpush1.bf16.msra.mxu0 %v1688
    %1754 = vmatprep.subr.bf16.mxu0 %v1691
    %1755 = vmatpush1.bf16.msra.mxu0 %v1690
    %1756 = vmatprep.subr.bf16.mxu0 %v1693
    %1757 = vmatpush1.bf16.msra.mxu0 %v1692
    %1758 = vmatprep.subr.bf16.mxu0 %v1695
    %1759 = vmatpush1.bf16.msra.mxu0 %v1694
    %1760 = vmatprep.subr.bf16.mxu0 %v1697
    %1761 = vmatpush1.bf16.msra.mxu0 %v1696
    %1762 = vmatprep.subr.bf16.mxu0 %v1699
    %1763 = vmatpush1.bf16.msra.mxu0 %v1698
    %1764 = vmatprep.subr.bf16.mxu0 %v1701
    %1765 = vmatpush1.bf16.msra.mxu0 %v1700
    %1766 = vmatprep.subr.bf16.mxu0 %v1703
    %1767 = vmatpush1.bf16.msra.mxu0 %v1702
    %1768 = vmatprep.subr.bf16.mxu0 %v1705
    %1769 = vmatpush1.bf16.msra.mxu0 %v1704
    %1770 = vmatprep.subr.bf16.mxu0 %v1707
    %1771 = vmatpush1.bf16.msra.mxu0 %v1706
    %1772 = vmatprep.subr.bf16.mxu0 %v1709
    %1773 = vmatpush1.bf16.msra.mxu0 %v1708
    %1774 = vmatprep.subr.bf16.mxu0 %v1711
    %1775 = vmatpush1.bf16.msra.mxu0 %v1710
    %1776 = vmatprep.subr.bf16.mxu0 %v1713
    %1777 = vmatpush1.bf16.msra.mxu0 %v1712
    %1778 = vmatprep.subr.bf16.mxu0 %v1715
    %1779 = vmatpush1.bf16.msra.mxu0 %v1714
    %1780 = vmatprep.subr.bf16.mxu0 %v1717
    %1781 = vmatpush1.bf16.msra.mxu0 %v1716
    %1782 = vmatprep.subr.bf16.mxu0 %v1719
    %1783 = vmatpush1.bf16.msra.mxu0 %v1718
    %1784 = vmatprep.mubr.bf16.mxu0 %v79
    %1785 = vmatmul.mubr.bf16.gmra.mrb[0].mxu0 %v78
    %v1786 = vpop.f32.mrb[0].mxu0
    %v1787 = vadd.f32 %v1585, %v1786
    %v1788 = vpop.f32.mrb[0].mxu0
    %v1789 = vadd.f32 %v1589, %v1788
    %v1790 = vpop.f32.mrb[0].mxu0
    %v1791 = vadd.f32 %v1585, %v1790
    %v1792 = vpop.f32.mrb[0].mxu0
    %v1793 = vadd.f32 %v1589, %v1792
    %1794 = vdwg.mxu0
    %v1795 = vmax.f32 %v1787, 0.0
    %v1796 = vmax.f32 %v1789, 0.0
    %v1797 = vmax.f32 %v1791, 0.0
    %v1798 = vmax.f32 %v1793, 0.0
    %v1799 = vpack.c.bf16 %v1797, %v1795
    %v1800 = vpack.c.bf16 %v1798, %v1796
    %v1801 = vld [vmem:[#allocation8 + $0x300] sm:$0xff]
    %v1802 = vld [vmem:[#allocation8 + $0x308] sm:$0xff]
    %v1803 = vld [vmem:[#allocation8 + $0x310] sm:$0xff]
    %v1804 = vld [vmem:[#allocation8 + $0x318] sm:$0xff]
    %v1805 = vld [vmem:[#allocation8 + $0x320] sm:$0xff]
    %v1806 = vld [vmem:[#allocation8 + $0x328] sm:$0xff]
    %v1807 = vld [vmem:[#allocation8 + $0x330] sm:$0xff]
    %v1808 = vld [vmem:[#allocation8 + $0x338] sm:$0xff]
    %v1809 = vld [vmem:[#allocation8 + $0x340] sm:$0xff]
    %v1810 = vld [vmem:[#allocation8 + $0x348] sm:$0xff]
    %v1811 = vld [vmem:[#allocation8 + $0x350] sm:$0xff]
    %v1812 = vld [vmem:[#allocation8 + $0x358] sm:$0xff]
    %v1813 = vld [vmem:[#allocation8 + $0x360] sm:$0xff]
    %v1814 = vld [vmem:[#allocation8 + $0x368] sm:$0xff]
    %v1815 = vld [vmem:[#allocation8 + $0x370] sm:$0xff]
    %v1816 = vld [vmem:[#allocation8 + $0x378] sm:$0xff]
    %v1817 = vld [vmem:[#allocation8 + $0x380] sm:$0xff]
    %v1818 = vld [vmem:[#allocation8 + $0x388] sm:$0xff]
    %v1819 = vld [vmem:[#allocation8 + $0x390] sm:$0xff]
    %v1820 = vld [vmem:[#allocation8 + $0x398] sm:$0xff]
    %v1821 = vld [vmem:[#allocation8 + $0x3a0] sm:$0xff]
    %v1822 = vld [vmem:[#allocation8 + $0x3a8] sm:$0xff]
    %v1823 = vld [vmem:[#allocation8 + $0x3b0] sm:$0xff]
    %v1824 = vld [vmem:[#allocation8 + $0x3b8] sm:$0xff]
    %v1825 = vld [vmem:[#allocation8 + $0x3c0] sm:$0xff]
    %v1826 = vld [vmem:[#allocation8 + $0x3c8] sm:$0xff]
    %v1827 = vld [vmem:[#allocation8 + $0x3d0] sm:$0xff]
    %v1828 = vld [vmem:[#allocation8 + $0x3d8] sm:$0xff]
    %v1829 = vld [vmem:[#allocation8 + $0x3e0] sm:$0xff]
    %v1830 = vld [vmem:[#allocation8 + $0x3e8] sm:$0xff]
    %v1831 = vld [vmem:[#allocation8 + $0x3f0] sm:$0xff]
    %v1832 = vld [vmem:[#allocation8 + $0x3f8] sm:$0xff]
    %v1865 = vunpack.c.l.b16 %v1801
    %v1866 = vunpack.c.h.b16 %v1801
    %v1867 = vunpack.c.l.b16 %v1802
    %v1868 = vunpack.c.h.b16 %v1802
    %v1869 = vunpack.c.l.b16 %v1803
    %v1870 = vunpack.c.h.b16 %v1803
    %v1871 = vunpack.c.l.b16 %v1804
    %v1872 = vunpack.c.h.b16 %v1804
    %v1873 = vunpack.c.l.b16 %v1805
    %v1874 = vunpack.c.h.b16 %v1805
    %v1875 = vunpack.c.l.b16 %v1806
    %v1876 = vunpack.c.h.b16 %v1806
    %v1877 = vunpack.c.l.b16 %v1807
    %v1878 = vunpack.c.h.b16 %v1807
    %v1879 = vunpack.c.l.b16 %v1808
    %v1880 = vunpack.c.h.b16 %v1808
    %v1881 = vunpack.c.l.b16 %v1809
    %v1882 = vunpack.c.h.b16 %v1809
    %v1883 = vunpack.c.l.b16 %v1810
    %v1884 = vunpack.c.h.b16 %v1810
    %v1885 = vunpack.c.l.b16 %v1811
    %v1886 = vunpack.c.h.b16 %v1811
    %v1887 = vunpack.c.l.b16 %v1812
    %v1888 = vunpack.c.h.b16 %v1812
    %v1889 = vunpack.c.l.b16 %v1813
    %v1890 = vunpack.c.h.b16 %v1813
    %v1891 = vunpack.c.l.b16 %v1814
    %v1892 = vunpack.c.h.b16 %v1814
    %v1893 = vunpack.c.l.b16 %v1815
    %v1894 = vunpack.c.h.b16 %v1815
    %v1895 = vunpack.c.l.b16 %v1816
    %v1896 = vunpack.c.h.b16 %v1816
    %v1897 = vunpack.c.l.b16 %v1817
    %v1898 = vunpack.c.h.b16 %v1817
    %v1899 = vunpack.c.l.b16 %v1818
    %v1900 = vunpack.c.h.b16 %v1818
    %v1901 = vunpack.c.l.b16 %v1819
    %v1902 = vunpack.c.h.b16 %v1819
    %v1903 = vunpack.c.l.b16 %v1820
    %v1904 = vunpack.c.h.b16 %v1820
    %v1905 = vunpack.c.l.b16 %v1821
    %v1906 = vunpack.c.h.b16 %v1821
    %v1907 = vunpack.c.l.b16 %v1822
    %v1908 = vunpack.c.h.b16 %v1822
    %v1909 = vunpack.c.l.b16 %v1823
    %v1910 = vunpack.c.h.b16 %v1823
    %v1911 = vunpack.c.l.b16 %v1824
    %v1912 = vunpack.c.h.b16 %v1824
    %v1913 = vunpack.c.l.b16 %v1825
    %v1914 = vunpack.c.h.b16 %v1825
    %v1915 = vunpack.c.l.b16 %v1826
    %v1916 = vunpack.c.h.b16 %v1826
    %v1917 = vunpack.c.l.b16 %v1827
    %v1918 = vunpack.c.h.b16 %v1827
    %v1919 = vunpack.c.l.b16 %v1828
    %v1920 = vunpack.c.h.b16 %v1828
    %v1921 = vunpack.c.l.b16 %v1829
    %v1922 = vunpack.c.h.b16 %v1829
    %v1923 = vunpack.c.l.b16 %v1830
    %v1924 = vunpack.c.h.b16 %v1830
    %v1925 = vunpack.c.l.b16 %v1831
    %v1926 = vunpack.c.h.b16 %v1831
    %v1927 = vunpack.c.l.b16 %v1832
    %v1928 = vunpack.c.h.b16 %v1832
    %v1929 = vpack.c.b16 %v1867, %v1865
    %v1930 = vpack.c.b16 %v1868, %v1866
    %v1931 = vpack.c.b16 %v1871, %v1869
    %v1932 = vpack.c.b16 %v1872, %v1870
    %v1933 = vpack.c.b16 %v1875, %v1873
    %v1934 = vpack.c.b16 %v1876, %v1874
    %v1935 = vpack.c.b16 %v1879, %v1877
    %v1936 = vpack.c.b16 %v1880, %v1878
    %v1937 = vpack.c.b16 %v1883, %v1881
    %v1938 = vpack.c.b16 %v1884, %v1882
    %v1939 = vpack.c.b16 %v1887, %v1885
    %v1940 = vpack.c.b16 %v1888, %v1886
    %v1941 = vpack.c.b16 %v1891, %v1889
    %v1942 = vpack.c.b16 %v1892, %v1890
    %v1943 = vpack.c.b16 %v1895, %v1893
    %v1944 = vpack.c.b16 %v1896, %v1894
    %v1945 = vpack.c.b16 %v1899, %v1897
    %v1946 = vpack.c.b16 %v1900, %v1898
    %v1947 = vpack.c.b16 %v1903, %v1901
    %v1948 = vpack.c.b16 %v1904, %v1902
    %v1949 = vpack.c.b16 %v1907, %v1905
    %v1950 = vpack.c.b16 %v1908, %v1906
    %v1951 = vpack.c.b16 %v1911, %v1909
    %v1952 = vpack.c.b16 %v1912, %v1910
    %v1953 = vpack.c.b16 %v1915, %v1913
    %v1954 = vpack.c.b16 %v1916, %v1914
    %v1955 = vpack.c.b16 %v1919, %v1917
    %v1956 = vpack.c.b16 %v1920, %v1918
    %v1957 = vpack.c.b16 %v1923, %v1921
    %v1958 = vpack.c.b16 %v1924, %v1922
    %v1959 = vpack.c.b16 %v1927, %v1925
    %v1960 = vpack.c.b16 %v1928, %v1926
    %1993 = vmatprep.subr.bf16.mxu0 %v1930
    %1994 = vmatpush1.bf16.msra.mxu0 %v1929
    %1995 = vmatprep.subr.bf16.mxu0 %v1932
    %1996 = vmatpush1.bf16.msra.mxu0 %v1931
    %1997 = vmatprep.subr.bf16.mxu0 %v1934
    %1998 = vmatpush1.bf16.msra.mxu0 %v1933
    %1999 = vmatprep.subr.bf16.mxu0 %v1936
    %2000 = vmatpush1.bf16.msra.mxu0 %v1935
    %2001 = vmatprep.subr.bf16.mxu0 %v1938
    %2002 = vmatpush1.bf16.msra.mxu0 %v1937
    %2003 = vmatprep.subr.bf16.mxu0 %v1940
    %2004 = vmatpush1.bf16.msra.mxu0 %v1939
    %2005 = vmatprep.subr.bf16.mxu0 %v1942
    %2006 = vmatpush1.bf16.msra.mxu0 %v1941
    %2007 = vmatprep.subr.bf16.mxu0 %v1944
    %2008 = vmatpush1.bf16.msra.mxu0 %v1943
    %2009 = vmatprep.subr.bf16.mxu0 %v1946
    %2010 = vmatpush1.bf16.msra.mxu0 %v1945
    %2011 = vmatprep.subr.bf16.mxu0 %v1948
    %2012 = vmatpush1.bf16.msra.mxu0 %v1947
    %2013 = vmatprep.subr.bf16.mxu0 %v1950
    %2014 = vmatpush1.bf16.msra.mxu0 %v1949
    %2015 = vmatprep.subr.bf16.mxu0 %v1952
    %2016 = vmatpush1.bf16.msra.mxu0 %v1951
    %2017 = vmatprep.subr.bf16.mxu0 %v1954
    %2018 = vmatpush1.bf16.msra.mxu0 %v1953
    %2019 = vmatprep.subr.bf16.mxu0 %v1956
    %2020 = vmatpush1.bf16.msra.mxu0 %v1955
    %2021 = vmatprep.subr.bf16.mxu0 %v1958
    %2022 = vmatpush1.bf16.msra.mxu0 %v1957
    %2023 = vmatprep.subr.bf16.mxu0 %v1960
    %2024 = vmatpush1.bf16.msra.mxu0 %v1959
    %2025 = vmatprep.mubr.bf16.mxu0 %v1800
    %2026 = vmatmul.mubr.bf16.gmra.mrb[0].mxu0 %v1799
    %v2027 = vpop.f32.mrb[0].mxu0
    %v2028 = vadd.f32 0.0, %v2027
    %v2029 = vpop.f32.mrb[0].mxu0
    %v2030 = vadd.f32 0.0, %v2029
    %v2031 = vpop.f32.mrb[0].mxu0
    %v2032 = vadd.f32 0.0, %v2031
    %v2033 = vpop.f32.mrb[0].mxu0
    %v2034 = vadd.f32 0.0, %v2033
    %2035 = vdwg.mxu0
    %v2036 = vadd.f32 %v1544, %v2028
    %v2037 = vadd.f32 %v1545, %v2030
    %v2038 = vadd.f32 %v1546, %v2032
    %v2039 = vadd.f32 %v1547, %v2034
    %v2040 = vld [vmem:[%s4] sm:$0x3]
    %v2042 = vlaneseq
    %v2043 = vshrl.u32 %v2042, 7
    %v2044 = vsub.s32 0, %v2043
    %v2045 = vrot.slane %v2040, %v2044
    %v2046 = vlaneseq
    %v2047 = vshrl.u32 %v2046, 7
    %v2048 = vsub.s32 1, %v2047
    %v2049 = vrot.slane %v2040, %v2048
    %v2052 = vadd.f32 %v2036, %v2045
    %v2053 = vadd.f32 %v2037, %v2049
    %v2054 = vadd.f32 %v2038, %v2045
    %v2055 = vadd.f32 %v2039, %v2049
    %2056 = vst [vmem:[#allocation10] sm:$0xff] %v2052
    %2057 = vst [vmem:[#allocation10 + $0x8] sm:$0xff] %v2053
    %2058 = vst [vmem:[#allocation10 + $0x10] sm:$0xff] %v2054
    %2059 = vst [vmem:[#allocation10 + $0x18] sm:$0xff] %v2055
    // Predicated region
    $region38: #{tpu_custom_call.1} parent=1 // pred_check
      _
    $region39: #{tpu_custom_call.1} parent=1 // pred_check_branch
      %2061 = sbr.rel (0) target = $region41
    $region40: #{tpu_custom_call.1} parent=1 // pred_region
      %s2063 = ssub.s32 512, 512
      %2064 = vsyncadd [#allocation4], %s2063
      %s2065 = sshll.u32 [#allocation10], 4
      %s2066 = int_to_ptr.vmem [resolvable:$true] %s2065
      %2071 = dma.vmem_to_hbm [thread:$0]  %s2066, 512, %s5, [#allocation4], 256, 256, 16
    $region41: #{tpu_custom_call.1} parent=1 // pred_fallthru
      _
    // Predicated region
    $region42: #{tpu_custom_call.1} parent=1 // pred_check
      _
    $region43: #{tpu_custom_call.1} parent=1 // pred_check_branch
      %2073 = sbr.rel (0) target = $region45
    $region44: #{tpu_custom_call.1} parent=1 // pred_region
      %2074 = dma.done [#allocation4], 512
    $region45: #{tpu_custom_call.1} parent=1 // pred_fallthru
      _
    %2075 = vsyncpa [#allocation3], 1
    %2076 = vsyncpa [#allocation6], 1
    %2077 = vsyncpa [#allocation9], 1
    %2078 = vsyncpa [#allocation4], 1

</llo_original>
